<compile_context>
chip_gen: v5e
topology: v5e:2x2
jax: 0.10.0
libtpu: 0.0.40
codegen_flags: <defaults>
</compile_context>

<pallas_src>
import jax
import jax.numpy as jnp
from jax.experimental import pallas as pl
from jax.experimental.pallas import tpu as pltpu

HIDDEN = 128      # hidden_size (small, lane-aligned stand-in for 2000)
VOCAB = 256       # output_size
SEQ_LEN = 8       # number of fused decode steps per kernel call
N_LAYERS = 1      # module default (the forward re-applies the SAME GRU +
                  # ReLU n_layers times, so one weight set is faithful)


def _decoder_kernel(tok_ref,        # scalar-prefetch: (T,) token ids (SMEM)
                    h_in_ref,       # (1, H)   incoming hidden state (f32)
                    emb_ref,        # (V, H)   embedding table (bf16, VMEM-resident)
                    wih_ref,        # (H, 3H)  GRU input weights, transposed (bf16)
                    bih_ref,        # (1, 3H)  GRU input bias (f32)
                    whh_ref,        # (H, 3H)  GRU hidden weights, transposed (bf16)
                    bhh_ref,        # (1, 3H)  GRU hidden bias (f32)
                    wout_ref,       # (H, V)   output Linear weight, transposed (bf16)
                    bout_ref,       # (1, V)   output Linear bias (f32)
                    logp_ref,       # out: (T, V) log-softmax per step (f32)
                    hout_ref,       # out: (1, H) final hidden (f32)
                    emb_f32):       # VMEM scratch: (V, H) f32 staged table
    H = hout_ref.shape[-1]
    T = logp_ref.shape[0]

    # Stage the bf16 table as f32 once: per-token gathers become plain 32-bit
    # dynamic-sublane loads (no packed-dtype dynamic slicing on the hot path).
    emb_f32[...] = emb_ref[...].astype(jnp.float32)

    # Hoist weight/bias tile loads out of the unrolled recurrence.
    wih = wih_ref[...]
    whh = whh_ref[...]
    bih = bih_ref[...]
    bhh = bhh_ref[...]

    h = h_in_ref[...]                               # (1, H) f32, carried in vregs
    hs = []
    # T is small and static: a fully unrolled loop gives the LLO scheduler one
    # basic block to overlap step t+1's MXU pushes with step t's EUP/VALU tail.
    # (For large T, switch to lax.fori_loop(..., unroll=k) + a (T,H) scratch.)
    for t in range(T):
        tok = tok_ref[t]                            # scalar token id from SMEM
        x = emb_f32[pl.ds(tok, 1), :]               # embedding(input).view(1,1,-1)
        for _ in range(N_LAYERS):
            x = jnp.maximum(x, 0.0)                 # F.relu(output)
            # GRU cell, PyTorch gate order (r, z, n); bf16 MXU, f32 accumulate.
            gi = jnp.dot(x.astype(jnp.bfloat16), wih,
                         preferred_element_type=jnp.float32) + bih
            gh = jnp.dot(h.astype(jnp.bfloat16), whh,
                         preferred_element_type=jnp.float32) + bhh
            r = jax.nn.sigmoid(gi[:, 0:H] + gh[:, 0:H])
            z = jax.nn.sigmoid(gi[:, H:2 * H] + gh[:, H:2 * H])
            n = jnp.tanh(gi[:, 2 * H:3 * H] + r * gh[:, 2 * H:3 * H])
            h = (1.0 - z) * n + z * h
            x = h                                   # GRU output == new hidden (seq=1)
        hs.append(h)

    hout_ref[...] = h                               # final hidden, written once

    # Hoisted projection + log_softmax, batched over all T steps:
    # one (T,H)@(H,V) MXU matmul (M=T instead of T matvecs) and one batched
    # softmax reduction, then a single lane-dense (T,V) store.
    hs_all = jnp.concatenate(hs, axis=0)            # (T, H) f32
    logits = jnp.dot(hs_all.astype(jnp.bfloat16), wout_ref[...],
                     preferred_element_type=jnp.float32) + bout_ref[...]
    m = jnp.max(logits, axis=-1, keepdims=True)
    lse = jnp.log(jnp.sum(jnp.exp(logits - m), axis=-1, keepdims=True)) + m
    logp_ref[...] = logits - lse


@jax.jit
def decoder_forward(tokens, hidden, emb, w_ih_t, b_ih, w_hh_t, b_hh,
                    w_out_t, b_out):
    """tokens: int32 (T,); hidden: f32 (1, H).

    Returns (log_probs (T, V) f32, final hidden (1, H) f32); row t equals the
    PyTorch forward applied to tokens[t] with the hidden state carried along.
    """
    T = tokens.shape[0]
    H = hidden.shape[-1]
    V = emb.shape[0]

    grid_spec = pltpu.PrefetchScalarGridSpec(
        num_scalar_prefetch=1,
        grid=(1,),                                   # single fused invocation
        in_specs=[
            pl.BlockSpec((1, H), lambda i, tok: (0, 0)),        # hidden
            pl.BlockSpec((V, H), lambda i, tok: (0, 0)),        # embedding table
            pl.BlockSpec((H, 3 * H), lambda i, tok: (0, 0)),    # W_ih^T
            pl.BlockSpec((1, 3 * H), lambda i, tok: (0, 0)),    # b_ih
            pl.BlockSpec((H, 3 * H), lambda i, tok: (0, 0)),    # W_hh^T
            pl.BlockSpec((1, 3 * H), lambda i, tok: (0, 0)),    # b_hh
            pl.BlockSpec((H, V), lambda i, tok: (0, 0)),        # W_out^T
            pl.BlockSpec((1, V), lambda i, tok: (0, 0)),        # b_out
        ],
        out_specs=[
            pl.BlockSpec((T, V), lambda i, tok: (0, 0)),        # (T,V) log-probs
            pl.BlockSpec((1, H), lambda i, tok: (0, 0)),        # final hidden
        ],
        scratch_shapes=[pltpu.VMEM((V, H), jnp.float32)],       # staged f32 table
    )
    out_shapes = (
        jax.ShapeDtypeStruct((T, V), jnp.float32),
        jax.ShapeDtypeStruct((1, H), jnp.float32),
    )
    logp, h_new = pl.pallas_call(
        _decoder_kernel,
        grid_spec=grid_spec,
        out_shape=out_shapes,
        compiler_params=pltpu.CompilerParams(
            dimension_semantics=("arbitrary",)),
    )(tokens, hidden, emb, w_ih_t, b_ih, w_hh_t, b_hh, w_out_t, b_out)
    return logp, h_new


def _reference_forward(tokens, hidden, emb, w_ih_t, b_ih, w_hh_t, b_hh,
                       w_out_t, b_out):
    """Pure-JAX reference mirroring the PyTorch forward (same dtype path)."""
    H = hidden.shape[-1]
    h = hidden
    outs = []
    for t in range(tokens.shape[0]):
        x = emb[tokens[t]][None, :].astype(jnp.float32)
        for _ in range(N_LAYERS):
            x = jnp.maximum(x, 0.0)
            gi = jnp.dot(x.astype(jnp.bfloat16), w_ih_t,
                         preferred_element_type=jnp.float32) + b_ih
            gh = jnp.dot(h.astype(jnp.bfloat16), w_hh_t,
                         preferred_element_type=jnp.float32) + b_hh
            r = jax.nn.sigmoid(gi[:, :H] + gh[:, :H])
            z = jax.nn.sigmoid(gi[:, H:2 * H] + gh[:, H:2 * H])
            n = jnp.tanh(gi[:, 2 * H:] + r * gh[:, 2 * H:])
            h = (1.0 - z) * n + z * h
            x = h
        logits = jnp.dot(x.astype(jnp.bfloat16), w_out_t,
                         preferred_element_type=jnp.float32) + b_out
        outs.append(jax.nn.log_softmax(logits, axis=-1))
    return jnp.concatenate(outs, axis=0), h


if __name__ == "__main__":
    key = jax.random.PRNGKey(0)
    ks = jax.random.split(key, 8)
    H, V, T = HIDDEN, VOCAB, SEQ_LEN
    scale = 1.0 / jnp.sqrt(H)

    # Parameter shapes match nn.Embedding / nn.GRU / nn.Linear.
    emb = jax.random.normal(ks[0], (V, H), jnp.float32)                       # embedding.weight
    w_ih = jax.random.uniform(ks[1], (3 * H, H), jnp.float32, -scale, scale)  # gru.weight_ih_l0
    w_hh = jax.random.uniform(ks[2], (3 * H, H), jnp.float32, -scale, scale)  # gru.weight_hh_l0
    b_ih = jax.random.uniform(ks[3], (3 * H,), jnp.float32, -scale, scale)    # gru.bias_ih_l0
    b_hh = jax.random.uniform(ks[4], (3 * H,), jnp.float32, -scale, scale)    # gru.bias_hh_l0
    w_out = jax.random.uniform(ks[5], (V, H), jnp.float32, -scale, scale)     # out.weight
    b_out = jax.random.uniform(ks[6], (V,), jnp.float32, -scale, scale)       # out.bias

    # (in, out) layout; heavy matrices in bf16 (halve HBM traffic), biases f32.
    emb_bf = emb.astype(jnp.bfloat16)
    w_ih_t = w_ih.T.astype(jnp.bfloat16)
    w_hh_t = w_hh.T.astype(jnp.bfloat16)
    w_out_t = w_out.T.astype(jnp.bfloat16)
    b_ih_r = b_ih[None, :]
    b_hh_r = b_hh[None, :]
    b_out_r = b_out[None, :]

    tokens = jax.random.randint(ks[7], (T,), 0, V, dtype=jnp.int32)  # decoder input ids
    hidden0 = jnp.zeros((1, H), jnp.float32)                         # initHidden() (1,1,H) -> (1,H)

    logp, h_new = decoder_forward(tokens, hidden0, emb_bf, w_ih_t, b_ih_r,
                                  w_hh_t, b_hh_r, w_out_t, b_out_r)
    jax.block_until_ready((logp, h_new))

    ref_logp, ref_h = _reference_forward(tokens, hidden0, emb_bf, w_ih_t, b_ih_r,
                                         w_hh_t, b_hh_r, w_out_t, b_out_r)
    assert logp.shape == (T, V) and h_new.shape == (1, H)
    assert jnp.allclose(logp, ref_logp, atol=5e-3, rtol=5e-3), "log-softmax mismatch"
    assert jnp.allclose(h_new, ref_h, atol=5e-3, rtol=5e-3), "hidden mismatch"

    print("KERNEL_OK")
</pallas_src>

<mosaic_0001>
module attributes {stable_mosaic.version = 11 : i64} {
  func.func @_decoder_kernel(%arg0: i32, %arg1: memref<8xi32, #tpu.memory_space<smem>>, %arg2: memref<1x128xf32, #tpu.memory_space<vmem>>, %arg3: memref<256x128xbf16, #tpu.memory_space<vmem>>, %arg4: memref<128x384xbf16, #tpu.memory_space<vmem>>, %arg5: memref<1x384xf32, #tpu.memory_space<vmem>>, %arg6: memref<128x384xbf16, #tpu.memory_space<vmem>>, %arg7: memref<1x384xf32, #tpu.memory_space<vmem>>, %arg8: memref<128x256xbf16, #tpu.memory_space<vmem>>, %arg9: memref<1x256xf32, #tpu.memory_space<vmem>>, %arg10: memref<8x256xf32, #tpu.memory_space<vmem>>, %arg11: memref<1x128xf32, #tpu.memory_space<vmem>>, %arg12: memref<256x128xf32, #tpu.memory_space<vmem>>) attributes {dimension_semantics = [#tpu.dimension_semantics<arbitrary>], iteration_bounds = array<i64: 1>, scalar_prefetch = 1 : i64, scratch_operands = 1 : i64, tpu.core_type = #tpu.core_type<tc>, window_params = [{pipeline_mode = #tpu.pipeline_mode<synchronous>, transform_indices = @transform_0, window_bounds = array<i64: 1, 128>}, {pipeline_mode = #tpu.pipeline_mode<synchronous>, transform_indices = @transform_1, window_bounds = array<i64: 256, 128>}, {pipeline_mode = #tpu.pipeline_mode<synchronous>, transform_indices = @transform_2, window_bounds = array<i64: 128, 384>}, {pipeline_mode = #tpu.pipeline_mode<synchronous>, transform_indices = @transform_3, window_bounds = array<i64: 1, 384>}, {pipeline_mode = #tpu.pipeline_mode<synchronous>, transform_indices = @transform_4, window_bounds = array<i64: 128, 384>}, {pipeline_mode = #tpu.pipeline_mode<synchronous>, transform_indices = @transform_5, window_bounds = array<i64: 1, 384>}, {pipeline_mode = #tpu.pipeline_mode<synchronous>, transform_indices = @transform_6, window_bounds = array<i64: 128, 256>}, {pipeline_mode = #tpu.pipeline_mode<synchronous>, transform_indices = @transform_7, window_bounds = array<i64: 1, 256>}, {pipeline_mode = #tpu.pipeline_mode<synchronous>, transform_indices = @transform_8, window_bounds = array<i64: 8, 256>}, {pipeline_mode = #tpu.pipeline_mode<synchronous>, transform_indices = @transform_9, window_bounds = array<i64: 1, 128>}]} {
    %c0 = arith.constant 0 : index
    %c0_0 = arith.constant 0 : index
    %0 = vector.load %arg3[%c0, %c0_0] : memref<256x128xbf16, #tpu.memory_space<vmem>>, vector<256x128xbf16>
    %1 = arith.extf %0 : vector<256x128xbf16> to vector<256x128xf32>
    %c0_1 = arith.constant 0 : index
    %c0_2 = arith.constant 0 : index
    %2 = vector.load %arg12[%c0_1, %c0_2] : memref<256x128xf32, #tpu.memory_space<vmem>>, vector<256x128xf32>
    tpu.vector_store %arg12[%c0_1, %c0_2], %1 {strides = array<i32>} : memref<256x128xf32, #tpu.memory_space<vmem>>, vector<256x128xf32>,
    %c0_3 = arith.constant 0 : index
    %c0_4 = arith.constant 0 : index
    %3 = vector.load %arg4[%c0_3, %c0_4] : memref<128x384xbf16, #tpu.memory_space<vmem>>, vector<128x384xbf16>
    %c0_5 = arith.constant 0 : index
    %c0_6 = arith.constant 0 : index
    %4 = vector.load %arg6[%c0_5, %c0_6] : memref<128x384xbf16, #tpu.memory_space<vmem>>, vector<128x384xbf16>
    %c0_7 = arith.constant 0 : index
    %c0_8 = arith.constant 0 : index
    %5 = vector.load %arg5[%c0_7, %c0_8] : memref<1x384xf32, #tpu.memory_space<vmem>>, vector<1x384xf32>
    %c0_9 = arith.constant 0 : index
    %c0_10 = arith.constant 0 : index
    %6 = vector.load %arg7[%c0_9, %c0_10] : memref<1x384xf32, #tpu.memory_space<vmem>>, vector<1x384xf32>
    %c0_11 = arith.constant 0 : index
    %c0_12 = arith.constant 0 : index
    %7 = vector.load %arg2[%c0_11, %c0_12] : memref<1x128xf32, #tpu.memory_space<vmem>>, vector<1x128xf32>
    %c0_13 = arith.constant 0 : index
    %8 = memref.load %arg1[%c0_13] : memref<8xi32, #tpu.memory_space<smem>>
    %9 = arith.index_cast %8 : i32 to index
    %c0_14 = arith.constant 0 : index
    %10 = vector.load %arg12[%9, %c0_14] : memref<256x128xf32, #tpu.memory_space<vmem>>, vector<1x128xf32>
    %cst = arith.constant 0.000000e+00 : f32
    %11 = vector.broadcast %cst : f32 to vector<1x128xf32>
    %12 = arith.maximumf %10, %11 : vector<1x128xf32>
    %13 = arith.truncf %12 : vector<1x128xf32> to vector<1x128xbf16>
    %cst_15 = arith.constant dense<0.000000e+00> : vector<1x384xf32>
    %14 = tpu.matmul %13, %3, %cst_15 {dimension_numbers = #tpu.dot_dimension_numbers<[1], [0], [0], [1], [0, 0, 1, 1], [], []>} : vector<1x128xbf16>, vector<128x384xbf16>, vector<1x384xf32> -> vector<1x384xf32>
    %15 = arith.addf %14, %5 : vector<1x384xf32>
    %16 = arith.truncf %7 : vector<1x128xf32> to vector<1x128xbf16>
    %cst_16 = arith.constant dense<0.000000e+00> : vector<1x384xf32>
    %17 = tpu.matmul %16, %4, %cst_16 {dimension_numbers = #tpu.dot_dimension_numbers<[1], [0], [0], [1], [0, 0, 1, 1], [], []>} : vector<1x128xbf16>, vector<128x384xbf16>, vector<1x384xf32> -> vector<1x384xf32>
    %18 = arith.addf %17, %6 : vector<1x384xf32>
    %19 = vector.extract_strided_slice %15 {offsets = [0, 0], sizes = [1, 128], strides = [1, 1]} : vector<1x384xf32> to vector<1x128xf32>
    %20 = vector.extract_strided_slice %18 {offsets = [0, 0], sizes = [1, 128], strides = [1, 1]} : vector<1x384xf32> to vector<1x128xf32>
    %21 = arith.addf %19, %20 : vector<1x128xf32>
    %22 = arith.negf %21 : vector<1x128xf32>
    %23 = math.exp %22 : vector<1x128xf32>
    %cst_17 = arith.constant 1.000000e+00 : f32
    %24 = vector.broadcast %cst_17 : f32 to vector<1x128xf32>
    %25 = arith.addf %24, %23 : vector<1x128xf32>
    %26 = arith.divf %24, %25 : vector<1x128xf32>
    %27 = vector.extract_strided_slice %15 {offsets = [0, 128], sizes = [1, 128], strides = [1, 1]} : vector<1x384xf32> to vector<1x128xf32>
    %28 = vector.extract_strided_slice %18 {offsets = [0, 128], sizes = [1, 128], strides = [1, 1]} : vector<1x384xf32> to vector<1x128xf32>
    %29 = arith.addf %27, %28 : vector<1x128xf32>
    %30 = arith.negf %29 : vector<1x128xf32>
    %31 = math.exp %30 : vector<1x128xf32>
    %cst_18 = arith.constant 1.000000e+00 : f32
    %32 = vector.broadcast %cst_18 : f32 to vector<1x128xf32>
    %33 = arith.addf %32, %31 : vector<1x128xf32>
    %34 = arith.divf %32, %33 : vector<1x128xf32>
    %35 = vector.extract_strided_slice %15 {offsets = [0, 256], sizes = [1, 128], strides = [1, 1]} : vector<1x384xf32> to vector<1x128xf32>
    %36 = vector.extract_strided_slice %18 {offsets = [0, 256], sizes = [1, 128], strides = [1, 1]} : vector<1x384xf32> to vector<1x128xf32>
    %37 = arith.mulf %26, %36 : vector<1x128xf32>
    %38 = arith.addf %35, %37 : vector<1x128xf32>
    %39 = math.tanh %38 : vector<1x128xf32>
    %cst_19 = arith.constant 1.000000e+00 : f32
    %40 = vector.broadcast %cst_19 : f32 to vector<1x128xf32>
    %41 = arith.subf %40, %34 : vector<1x128xf32>
    %42 = arith.mulf %41, %39 : vector<1x128xf32>
    %43 = arith.mulf %34, %7 : vector<1x128xf32>
    %44 = arith.addf %42, %43 : vector<1x128xf32>
    %c1 = arith.constant 1 : index
    %45 = memref.load %arg1[%c1] : memref<8xi32, #tpu.memory_space<smem>>
    %46 = arith.index_cast %45 : i32 to index
    %c0_20 = arith.constant 0 : index
    %47 = vector.load %arg12[%46, %c0_20] : memref<256x128xf32, #tpu.memory_space<vmem>>, vector<1x128xf32>
    %cst_21 = arith.constant 0.000000e+00 : f32
    %48 = vector.broadcast %cst_21 : f32 to vector<1x128xf32>
    %49 = arith.maximumf %47, %48 : vector<1x128xf32>
    %50 = arith.truncf %49 : vector<1x128xf32> to vector<1x128xbf16>
    %cst_22 = arith.constant dense<0.000000e+00> : vector<1x384xf32>
    %51 = tpu.matmul %50, %3, %cst_22 {dimension_numbers = #tpu.dot_dimension_numbers<[1], [0], [0], [1], [0, 0, 1, 1], [], []>} : vector<1x128xbf16>, vector<128x384xbf16>, vector<1x384xf32> -> vector<1x384xf32>
    %52 = arith.addf %51, %5 : vector<1x384xf32>
    %53 = arith.truncf %44 : vector<1x128xf32> to vector<1x128xbf16>
    %cst_23 = arith.constant dense<0.000000e+00> : vector<1x384xf32>
    %54 = tpu.matmul %53, %4, %cst_23 {dimension_numbers = #tpu.dot_dimension_numbers<[1], [0], [0], [1], [0, 0, 1, 1], [], []>} : vector<1x128xbf16>, vector<128x384xbf16>, vector<1x384xf32> -> vector<1x384xf32>
    %55 = arith.addf %54, %6 : vector<1x384xf32>
    %56 = vector.extract_strided_slice %52 {offsets = [0, 0], sizes = [1, 128], strides = [1, 1]} : vector<1x384xf32> to vector<1x128xf32>
    %57 = vector.extract_strided_slice %55 {offsets = [0, 0], sizes = [1, 128], strides = [1, 1]} : vector<1x384xf32> to vector<1x128xf32>
    %58 = arith.addf %56, %57 : vector<1x128xf32>
    %59 = arith.negf %58 : vector<1x128xf32>
    %60 = math.exp %59 : vector<1x128xf32>
    %cst_24 = arith.constant 1.000000e+00 : f32
    %61 = vector.broadcast %cst_24 : f32 to vector<1x128xf32>
    %62 = arith.addf %61, %60 : vector<1x128xf32>
    %63 = arith.divf %61, %62 : vector<1x128xf32>
    %64 = vector.extract_strided_slice %52 {offsets = [0, 128], sizes = [1, 128], strides = [1, 1]} : vector<1x384xf32> to vector<1x128xf32>
    %65 = vector.extract_strided_slice %55 {offsets = [0, 128], sizes = [1, 128], strides = [1, 1]} : vector<1x384xf32> to vector<1x128xf32>
    %66 = arith.addf %64, %65 : vector<1x128xf32>
    %67 = arith.negf %66 : vector<1x128xf32>
    %68 = math.exp %67 : vector<1x128xf32>
    %cst_25 = arith.constant 1.000000e+00 : f32
    %69 = vector.broadcast %cst_25 : f32 to vector<1x128xf32>
    %70 = arith.addf %69, %68 : vector<1x128xf32>
    %71 = arith.divf %69, %70 : vector<1x128xf32>
    %72 = vector.extract_strided_slice %52 {offsets = [0, 256], sizes = [1, 128], strides = [1, 1]} : vector<1x384xf32> to vector<1x128xf32>
    %73 = vector.extract_strided_slice %55 {offsets = [0, 256], sizes = [1, 128], strides = [1, 1]} : vector<1x384xf32> to vector<1x128xf32>
    %74 = arith.mulf %63, %73 : vector<1x128xf32>
    %75 = arith.addf %72, %74 : vector<1x128xf32>
    %76 = math.tanh %75 : vector<1x128xf32>
    %cst_26 = arith.constant 1.000000e+00 : f32
    %77 = vector.broadcast %cst_26 : f32 to vector<1x128xf32>
    %78 = arith.subf %77, %71 : vector<1x128xf32>
    %79 = arith.mulf %78, %76 : vector<1x128xf32>
    %80 = arith.mulf %71, %44 : vector<1x128xf32>
    %81 = arith.addf %79, %80 : vector<1x128xf32>
    %c2 = arith.constant 2 : index
    %82 = memref.load %arg1[%c2] : memref<8xi32, #tpu.memory_space<smem>>
    %83 = arith.index_cast %82 : i32 to index
    %c0_27 = arith.constant 0 : index
    %84 = vector.load %arg12[%83, %c0_27] : memref<256x128xf32, #tpu.memory_space<vmem>>, vector<1x128xf32>
    %cst_28 = arith.constant 0.000000e+00 : f32
    %85 = vector.broadcast %cst_28 : f32 to vector<1x128xf32>
    %86 = arith.maximumf %84, %85 : vector<1x128xf32>
    %87 = arith.truncf %86 : vector<1x128xf32> to vector<1x128xbf16>
    %cst_29 = arith.constant dense<0.000000e+00> : vector<1x384xf32>
    %88 = tpu.matmul %87, %3, %cst_29 {dimension_numbers = #tpu.dot_dimension_numbers<[1], [0], [0], [1], [0, 0, 1, 1], [], []>} : vector<1x128xbf16>, vector<128x384xbf16>, vector<1x384xf32> -> vector<1x384xf32>
    %89 = arith.addf %88, %5 : vector<1x384xf32>
    %90 = arith.truncf %81 : vector<1x128xf32> to vector<1x128xbf16>
    %cst_30 = arith.constant dense<0.000000e+00> : vector<1x384xf32>
    %91 = tpu.matmul %90, %4, %cst_30 {dimension_numbers = #tpu.dot_dimension_numbers<[1], [0], [0], [1], [0, 0, 1, 1], [], []>} : vector<1x128xbf16>, vector<128x384xbf16>, vector<1x384xf32> -> vector<1x384xf32>
    %92 = arith.addf %91, %6 : vector<1x384xf32>
    %93 = vector.extract_strided_slice %89 {offsets = [0, 0], sizes = [1, 128], strides = [1, 1]} : vector<1x384xf32> to vector<1x128xf32>
    %94 = vector.extract_strided_slice %92 {offsets = [0, 0], sizes = [1, 128], strides = [1, 1]} : vector<1x384xf32> to vector<1x128xf32>
    %95 = arith.addf %93, %94 : vector<1x128xf32>
    %96 = arith.negf %95 : vector<1x128xf32>
    %97 = math.exp %96 : vector<1x128xf32>
    %cst_31 = arith.constant 1.000000e+00 : f32
    %98 = vector.broadcast %cst_31 : f32 to vector<1x128xf32>
    %99 = arith.addf %98, %97 : vector<1x128xf32>
    %100 = arith.divf %98, %99 : vector<1x128xf32>
    %101 = vector.extract_strided_slice %89 {offsets = [0, 128], sizes = [1, 128], strides = [1, 1]} : vector<1x384xf32> to vector<1x128xf32>
    %102 = vector.extract_strided_slice %92 {offsets = [0, 128], sizes = [1, 128], strides = [1, 1]} : vector<1x384xf32> to vector<1x128xf32>
    %103 = arith.addf %101, %102 : vector<1x128xf32>
    %104 = arith.negf %103 : vector<1x128xf32>
    %105 = math.exp %104 : vector<1x128xf32>
    %cst_32 = arith.constant 1.000000e+00 : f32
    %106 = vector.broadcast %cst_32 : f32 to vector<1x128xf32>
    %107 = arith.addf %106, %105 : vector<1x128xf32>
    %108 = arith.divf %106, %107 : vector<1x128xf32>
    %109 = vector.extract_strided_slice %89 {offsets = [0, 256], sizes = [1, 128], strides = [1, 1]} : vector<1x384xf32> to vector<1x128xf32>
    %110 = vector.extract_strided_slice %92 {offsets = [0, 256], sizes = [1, 128], strides = [1, 1]} : vector<1x384xf32> to vector<1x128xf32>
    %111 = arith.mulf %100, %110 : vector<1x128xf32>
    %112 = arith.addf %109, %111 : vector<1x128xf32>
    %113 = math.tanh %112 : vector<1x128xf32>
    %cst_33 = arith.constant 1.000000e+00 : f32
    %114 = vector.broadcast %cst_33 : f32 to vector<1x128xf32>
    %115 = arith.subf %114, %108 : vector<1x128xf32>
    %116 = arith.mulf %115, %113 : vector<1x128xf32>
    %117 = arith.mulf %108, %81 : vector<1x128xf32>
    %118 = arith.addf %116, %117 : vector<1x128xf32>
    %c3 = arith.constant 3 : index
    %119 = memref.load %arg1[%c3] : memref<8xi32, #tpu.memory_space<smem>>
    %120 = arith.index_cast %119 : i32 to index
    %c0_34 = arith.constant 0 : index
    %121 = vector.load %arg12[%120, %c0_34] : memref<256x128xf32, #tpu.memory_space<vmem>>, vector<1x128xf32>
    %cst_35 = arith.constant 0.000000e+00 : f32
    %122 = vector.broadcast %cst_35 : f32 to vector<1x128xf32>
    %123 = arith.maximumf %121, %122 : vector<1x128xf32>
    %124 = arith.truncf %123 : vector<1x128xf32> to vector<1x128xbf16>
    %cst_36 = arith.constant dense<0.000000e+00> : vector<1x384xf32>
    %125 = tpu.matmul %124, %3, %cst_36 {dimension_numbers = #tpu.dot_dimension_numbers<[1], [0], [0], [1], [0, 0, 1, 1], [], []>} : vector<1x128xbf16>, vector<128x384xbf16>, vector<1x384xf32> -> vector<1x384xf32>
    %126 = arith.addf %125, %5 : vector<1x384xf32>
    %127 = arith.truncf %118 : vector<1x128xf32> to vector<1x128xbf16>
    %cst_37 = arith.constant dense<0.000000e+00> : vector<1x384xf32>
    %128 = tpu.matmul %127, %4, %cst_37 {dimension_numbers = #tpu.dot_dimension_numbers<[1], [0], [0], [1], [0, 0, 1, 1], [], []>} : vector<1x128xbf16>, vector<128x384xbf16>, vector<1x384xf32> -> vector<1x384xf32>
    %129 = arith.addf %128, %6 : vector<1x384xf32>
    %130 = vector.extract_strided_slice %126 {offsets = [0, 0], sizes = [1, 128], strides = [1, 1]} : vector<1x384xf32> to vector<1x128xf32>
    %131 = vector.extract_strided_slice %129 {offsets = [0, 0], sizes = [1, 128], strides = [1, 1]} : vector<1x384xf32> to vector<1x128xf32>
    %132 = arith.addf %130, %131 : vector<1x128xf32>
    %133 = arith.negf %132 : vector<1x128xf32>
    %134 = math.exp %133 : vector<1x128xf32>
    %cst_38 = arith.constant 1.000000e+00 : f32
    %135 = vector.broadcast %cst_38 : f32 to vector<1x128xf32>
    %136 = arith.addf %135, %134 : vector<1x128xf32>
    %137 = arith.divf %135, %136 : vector<1x128xf32>
    %138 = vector.extract_strided_slice %126 {offsets = [0, 128], sizes = [1, 128], strides = [1, 1]} : vector<1x384xf32> to vector<1x128xf32>
    %139 = vector.extract_strided_slice %129 {offsets = [0, 128], sizes = [1, 128], strides = [1, 1]} : vector<1x384xf32> to vector<1x128xf32>
    %140 = arith.addf %138, %139 : vector<1x128xf32>
    %141 = arith.negf %140 : vector<1x128xf32>
    %142 = math.exp %141 : vector<1x128xf32>
    %cst_39 = arith.constant 1.000000e+00 : f32
    %143 = vector.broadcast %cst_39 : f32 to vector<1x128xf32>
    %144 = arith.addf %143, %142 : vector<1x128xf32>
    %145 = arith.divf %143, %144 : vector<1x128xf32>
    %146 = vector.extract_strided_slice %126 {offsets = [0, 256], sizes = [1, 128], strides = [1, 1]} : vector<1x384xf32> to vector<1x128xf32>
    %147 = vector.extract_strided_slice %129 {offsets = [0, 256], sizes = [1, 128], strides = [1, 1]} : vector<1x384xf32> to vector<1x128xf32>
    %148 = arith.mulf %137, %147 : vector<1x128xf32>
    %149 = arith.addf %146, %148 : vector<1x128xf32>
    %150 = math.tanh %149 : vector<1x128xf32>
    %cst_40 = arith.constant 1.000000e+00 : f32
    %151 = vector.broadcast %cst_40 : f32 to vector<1x128xf32>
    %152 = arith.subf %151, %145 : vector<1x128xf32>
    %153 = arith.mulf %152, %150 : vector<1x128xf32>
    %154 = arith.mulf %145, %118 : vector<1x128xf32>
    %155 = arith.addf %153, %154 : vector<1x128xf32>
    %c4 = arith.constant 4 : index
    %156 = memref.load %arg1[%c4] : memref<8xi32, #tpu.memory_space<smem>>
    %157 = arith.index_cast %156 : i32 to index
    %c0_41 = arith.constant 0 : index
    %158 = vector.load %arg12[%157, %c0_41] : memref<256x128xf32, #tpu.memory_space<vmem>>, vector<1x128xf32>
    %cst_42 = arith.constant 0.000000e+00 : f32
    %159 = vector.broadcast %cst_42 : f32 to vector<1x128xf32>
    %160 = arith.maximumf %158, %159 : vector<1x128xf32>
    %161 = arith.truncf %160 : vector<1x128xf32> to vector<1x128xbf16>
    %cst_43 = arith.constant dense<0.000000e+00> : vector<1x384xf32>
    %162 = tpu.matmul %161, %3, %cst_43 {dimension_numbers = #tpu.dot_dimension_numbers<[1], [0], [0], [1], [0, 0, 1, 1], [], []>} : vector<1x128xbf16>, vector<128x384xbf16>, vector<1x384xf32> -> vector<1x384xf32>
    %163 = arith.addf %162, %5 : vector<1x384xf32>
    %164 = arith.truncf %155 : vector<1x128xf32> to vector<1x128xbf16>
    %cst_44 = arith.constant dense<0.000000e+00> : vector<1x384xf32>
    %165 = tpu.matmul %164, %4, %cst_44 {dimension_numbers = #tpu.dot_dimension_numbers<[1], [0], [0], [1], [0, 0, 1, 1], [], []>} : vector<1x128xbf16>, vector<128x384xbf16>, vector<1x384xf32> -> vector<1x384xf32>
    %166 = arith.addf %165, %6 : vector<1x384xf32>
    %167 = vector.extract_strided_slice %163 {offsets = [0, 0], sizes = [1, 128], strides = [1, 1]} : vector<1x384xf32> to vector<1x128xf32>
    %168 = vector.extract_strided_slice %166 {offsets = [0, 0], sizes = [1, 128], strides = [1, 1]} : vector<1x384xf32> to vector<1x128xf32>
    %169 = arith.addf %167, %168 : vector<1x128xf32>
    %170 = arith.negf %169 : vector<1x128xf32>
    %171 = math.exp %170 : vector<1x128xf32>
    %cst_45 = arith.constant 1.000000e+00 : f32
    %172 = vector.broadcast %cst_45 : f32 to vector<1x128xf32>
    %173 = arith.addf %172, %171 : vector<1x128xf32>
    %174 = arith.divf %172, %173 : vector<1x128xf32>
    %175 = vector.extract_strided_slice %163 {offsets = [0, 128], sizes = [1, 128], strides = [1, 1]} : vector<1x384xf32> to vector<1x128xf32>
    %176 = vector.extract_strided_slice %166 {offsets = [0, 128], sizes = [1, 128], strides = [1, 1]} : vector<1x384xf32> to vector<1x128xf32>
    %177 = arith.addf %175, %176 : vector<1x128xf32>
    %178 = arith.negf %177 : vector<1x128xf32>
    %179 = math.exp %178 : vector<1x128xf32>
    %cst_46 = arith.constant 1.000000e+00 : f32
    %180 = vector.broadcast %cst_46 : f32 to vector<1x128xf32>
    %181 = arith.addf %180, %179 : vector<1x128xf32>
    %182 = arith.divf %180, %181 : vector<1x128xf32>
    %183 = vector.extract_strided_slice %163 {offsets = [0, 256], sizes = [1, 128], strides = [1, 1]} : vector<1x384xf32> to vector<1x128xf32>
    %184 = vector.extract_strided_slice %166 {offsets = [0, 256], sizes = [1, 128], strides = [1, 1]} : vector<1x384xf32> to vector<1x128xf32>
    %185 = arith.mulf %174, %184 : vector<1x128xf32>
    %186 = arith.addf %183, %185 : vector<1x128xf32>
    %187 = math.tanh %186 : vector<1x128xf32>
    %cst_47 = arith.constant 1.000000e+00 : f32
    %188 = vector.broadcast %cst_47 : f32 to vector<1x128xf32>
    %189 = arith.subf %188, %182 : vector<1x128xf32>
    %190 = arith.mulf %189, %187 : vector<1x128xf32>
    %191 = arith.mulf %182, %155 : vector<1x128xf32>
    %192 = arith.addf %190, %191 : vector<1x128xf32>
    %c5 = arith.constant 5 : index
    %193 = memref.load %arg1[%c5] : memref<8xi32, #tpu.memory_space<smem>>
    %194 = arith.index_cast %193 : i32 to index
    %c0_48 = arith.constant 0 : index
    %195 = vector.load %arg12[%194, %c0_48] : memref<256x128xf32, #tpu.memory_space<vmem>>, vector<1x128xf32>
    %cst_49 = arith.constant 0.000000e+00 : f32
    %196 = vector.broadcast %cst_49 : f32 to vector<1x128xf32>
    %197 = arith.maximumf %195, %196 : vector<1x128xf32>
    %198 = arith.truncf %197 : vector<1x128xf32> to vector<1x128xbf16>
    %cst_50 = arith.constant dense<0.000000e+00> : vector<1x384xf32>
    %199 = tpu.matmul %198, %3, %cst_50 {dimension_numbers = #tpu.dot_dimension_numbers<[1], [0], [0], [1], [0, 0, 1, 1], [], []>} : vector<1x128xbf16>, vector<128x384xbf16>, vector<1x384xf32> -> vector<1x384xf32>
    %200 = arith.addf %199, %5 : vector<1x384xf32>
    %201 = arith.truncf %192 : vector<1x128xf32> to vector<1x128xbf16>
    %cst_51 = arith.constant dense<0.000000e+00> : vector<1x384xf32>
    %202 = tpu.matmul %201, %4, %cst_51 {dimension_numbers = #tpu.dot_dimension_numbers<[1], [0], [0], [1], [0, 0, 1, 1], [], []>} : vector<1x128xbf16>, vector<128x384xbf16>, vector<1x384xf32> -> vector<1x384xf32>
    %203 = arith.addf %202, %6 : vector<1x384xf32>
    %204 = vector.extract_strided_slice %200 {offsets = [0, 0], sizes = [1, 128], strides = [1, 1]} : vector<1x384xf32> to vector<1x128xf32>
    %205 = vector.extract_strided_slice %203 {offsets = [0, 0], sizes = [1, 128], strides = [1, 1]} : vector<1x384xf32> to vector<1x128xf32>
    %206 = arith.addf %204, %205 : vector<1x128xf32>
    %207 = arith.negf %206 : vector<1x128xf32>
    %208 = math.exp %207 : vector<1x128xf32>
    %cst_52 = arith.constant 1.000000e+00 : f32
    %209 = vector.broadcast %cst_52 : f32 to vector<1x128xf32>
    %210 = arith.addf %209, %208 : vector<1x128xf32>
    %211 = arith.divf %209, %210 : vector<1x128xf32>
    %212 = vector.extract_strided_slice %200 {offsets = [0, 128], sizes = [1, 128], strides = [1, 1]} : vector<1x384xf32> to vector<1x128xf32>
    %213 = vector.extract_strided_slice %203 {offsets = [0, 128], sizes = [1, 128], strides = [1, 1]} : vector<1x384xf32> to vector<1x128xf32>
    %214 = arith.addf %212, %213 : vector<1x128xf32>
    %215 = arith.negf %214 : vector<1x128xf32>
    %216 = math.exp %215 : vector<1x128xf32>
    %cst_53 = arith.constant 1.000000e+00 : f32
    %217 = vector.broadcast %cst_53 : f32 to vector<1x128xf32>
    %218 = arith.addf %217, %216 : vector<1x128xf32>
    %219 = arith.divf %217, %218 : vector<1x128xf32>
    %220 = vector.extract_strided_slice %200 {offsets = [0, 256], sizes = [1, 128], strides = [1, 1]} : vector<1x384xf32> to vector<1x128xf32>
    %221 = vector.extract_strided_slice %203 {offsets = [0, 256], sizes = [1, 128], strides = [1, 1]} : vector<1x384xf32> to vector<1x128xf32>
    %222 = arith.mulf %211, %221 : vector<1x128xf32>
    %223 = arith.addf %220, %222 : vector<1x128xf32>
    %224 = math.tanh %223 : vector<1x128xf32>
    %cst_54 = arith.constant 1.000000e+00 : f32
    %225 = vector.broadcast %cst_54 : f32 to vector<1x128xf32>
    %226 = arith.subf %225, %219 : vector<1x128xf32>
    %227 = arith.mulf %226, %224 : vector<1x128xf32>
    %228 = arith.mulf %219, %192 : vector<1x128xf32>
    %229 = arith.addf %227, %228 : vector<1x128xf32>
    %c6 = arith.constant 6 : index
    %230 = memref.load %arg1[%c6] : memref<8xi32, #tpu.memory_space<smem>>
    %231 = arith.index_cast %230 : i32 to index
    %c0_55 = arith.constant 0 : index
    %232 = vector.load %arg12[%231, %c0_55] : memref<256x128xf32, #tpu.memory_space<vmem>>, vector<1x128xf32>
    %cst_56 = arith.constant 0.000000e+00 : f32
    %233 = vector.broadcast %cst_56 : f32 to vector<1x128xf32>
    %234 = arith.maximumf %232, %233 : vector<1x128xf32>
    %235 = arith.truncf %234 : vector<1x128xf32> to vector<1x128xbf16>
    %cst_57 = arith.constant dense<0.000000e+00> : vector<1x384xf32>
    %236 = tpu.matmul %235, %3, %cst_57 {dimension_numbers = #tpu.dot_dimension_numbers<[1], [0], [0], [1], [0, 0, 1, 1], [], []>} : vector<1x128xbf16>, vector<128x384xbf16>, vector<1x384xf32> -> vector<1x384xf32>
    %237 = arith.addf %236, %5 : vector<1x384xf32>
    %238 = arith.truncf %229 : vector<1x128xf32> to vector<1x128xbf16>
    %cst_58 = arith.constant dense<0.000000e+00> : vector<1x384xf32>
    %239 = tpu.matmul %238, %4, %cst_58 {dimension_numbers = #tpu.dot_dimension_numbers<[1], [0], [0], [1], [0, 0, 1, 1], [], []>} : vector<1x128xbf16>, vector<128x384xbf16>, vector<1x384xf32> -> vector<1x384xf32>
    %240 = arith.addf %239, %6 : vector<1x384xf32>
    %241 = vector.extract_strided_slice %237 {offsets = [0, 0], sizes = [1, 128], strides = [1, 1]} : vector<1x384xf32> to vector<1x128xf32>
    %242 = vector.extract_strided_slice %240 {offsets = [0, 0], sizes = [1, 128], strides = [1, 1]} : vector<1x384xf32> to vector<1x128xf32>
    %243 = arith.addf %241, %242 : vector<1x128xf32>
    %244 = arith.negf %243 : vector<1x128xf32>
    %245 = math.exp %244 : vector<1x128xf32>
    %cst_59 = arith.constant 1.000000e+00 : f32
    %246 = vector.broadcast %cst_59 : f32 to vector<1x128xf32>
    %247 = arith.addf %246, %245 : vector<1x128xf32>
    %248 = arith.divf %246, %247 : vector<1x128xf32>
    %249 = vector.extract_strided_slice %237 {offsets = [0, 128], sizes = [1, 128], strides = [1, 1]} : vector<1x384xf32> to vector<1x128xf32>
    %250 = vector.extract_strided_slice %240 {offsets = [0, 128], sizes = [1, 128], strides = [1, 1]} : vector<1x384xf32> to vector<1x128xf32>
    %251 = arith.addf %249, %250 : vector<1x128xf32>
    %252 = arith.negf %251 : vector<1x128xf32>
    %253 = math.exp %252 : vector<1x128xf32>
    %cst_60 = arith.constant 1.000000e+00 : f32
    %254 = vector.broadcast %cst_60 : f32 to vector<1x128xf32>
    %255 = arith.addf %254, %253 : vector<1x128xf32>
    %256 = arith.divf %254, %255 : vector<1x128xf32>
    %257 = vector.extract_strided_slice %237 {offsets = [0, 256], sizes = [1, 128], strides = [1, 1]} : vector<1x384xf32> to vector<1x128xf32>
    %258 = vector.extract_strided_slice %240 {offsets = [0, 256], sizes = [1, 128], strides = [1, 1]} : vector<1x384xf32> to vector<1x128xf32>
    %259 = arith.mulf %248, %258 : vector<1x128xf32>
    %260 = arith.addf %257, %259 : vector<1x128xf32>
    %261 = math.tanh %260 : vector<1x128xf32>
    %cst_61 = arith.constant 1.000000e+00 : f32
    %262 = vector.broadcast %cst_61 : f32 to vector<1x128xf32>
    %263 = arith.subf %262, %256 : vector<1x128xf32>
    %264 = arith.mulf %263, %261 : vector<1x128xf32>
    %265 = arith.mulf %256, %229 : vector<1x128xf32>
    %266 = arith.addf %264, %265 : vector<1x128xf32>
    %c7 = arith.constant 7 : index
    %267 = memref.load %arg1[%c7] : memref<8xi32, #tpu.memory_space<smem>>
    %268 = arith.index_cast %267 : i32 to index
    %c0_62 = arith.constant 0 : index
    %269 = vector.load %arg12[%268, %c0_62] : memref<256x128xf32, #tpu.memory_space<vmem>>, vector<1x128xf32>
    %cst_63 = arith.constant 0.000000e+00 : f32
    %270 = vector.broadcast %cst_63 : f32 to vector<1x128xf32>
    %271 = arith.maximumf %269, %270 : vector<1x128xf32>
    %272 = arith.truncf %271 : vector<1x128xf32> to vector<1x128xbf16>
    %cst_64 = arith.constant dense<0.000000e+00> : vector<1x384xf32>
    %273 = tpu.matmul %272, %3, %cst_64 {dimension_numbers = #tpu.dot_dimension_numbers<[1], [0], [0], [1], [0, 0, 1, 1], [], []>} : vector<1x128xbf16>, vector<128x384xbf16>, vector<1x384xf32> -> vector<1x384xf32>
    %274 = arith.addf %273, %5 : vector<1x384xf32>
    %275 = arith.truncf %266 : vector<1x128xf32> to vector<1x128xbf16>
    %cst_65 = arith.constant dense<0.000000e+00> : vector<1x384xf32>
    %276 = tpu.matmul %275, %4, %cst_65 {dimension_numbers = #tpu.dot_dimension_numbers<[1], [0], [0], [1], [0, 0, 1, 1], [], []>} : vector<1x128xbf16>, vector<128x384xbf16>, vector<1x384xf32> -> vector<1x384xf32>
    %277 = arith.addf %276, %6 : vector<1x384xf32>
    %278 = vector.extract_strided_slice %274 {offsets = [0, 0], sizes = [1, 128], strides = [1, 1]} : vector<1x384xf32> to vector<1x128xf32>
    %279 = vector.extract_strided_slice %277 {offsets = [0, 0], sizes = [1, 128], strides = [1, 1]} : vector<1x384xf32> to vector<1x128xf32>
    %280 = arith.addf %278, %279 : vector<1x128xf32>
    %281 = arith.negf %280 : vector<1x128xf32>
    %282 = math.exp %281 : vector<1x128xf32>
    %cst_66 = arith.constant 1.000000e+00 : f32
    %283 = vector.broadcast %cst_66 : f32 to vector<1x128xf32>
    %284 = arith.addf %283, %282 : vector<1x128xf32>
    %285 = arith.divf %283, %284 : vector<1x128xf32>
    %286 = vector.extract_strided_slice %274 {offsets = [0, 128], sizes = [1, 128], strides = [1, 1]} : vector<1x384xf32> to vector<1x128xf32>
    %287 = vector.extract_strided_slice %277 {offsets = [0, 128], sizes = [1, 128], strides = [1, 1]} : vector<1x384xf32> to vector<1x128xf32>
    %288 = arith.addf %286, %287 : vector<1x128xf32>
    %289 = arith.negf %288 : vector<1x128xf32>
    %290 = math.exp %289 : vector<1x128xf32>
    %cst_67 = arith.constant 1.000000e+00 : f32
    %291 = vector.broadcast %cst_67 : f32 to vector<1x128xf32>
    %292 = arith.addf %291, %290 : vector<1x128xf32>
    %293 = arith.divf %291, %292 : vector<1x128xf32>
    %294 = vector.extract_strided_slice %274 {offsets = [0, 256], sizes = [1, 128], strides = [1, 1]} : vector<1x384xf32> to vector<1x128xf32>
    %295 = vector.extract_strided_slice %277 {offsets = [0, 256], sizes = [1, 128], strides = [1, 1]} : vector<1x384xf32> to vector<1x128xf32>
    %296 = arith.mulf %285, %295 : vector<1x128xf32>
    %297 = arith.addf %294, %296 : vector<1x128xf32>
    %298 = math.tanh %297 : vector<1x128xf32>
    %cst_68 = arith.constant 1.000000e+00 : f32
    %299 = vector.broadcast %cst_68 : f32 to vector<1x128xf32>
    %300 = arith.subf %299, %293 : vector<1x128xf32>
    %301 = arith.mulf %300, %298 : vector<1x128xf32>
    %302 = arith.mulf %293, %266 : vector<1x128xf32>
    %303 = arith.addf %301, %302 : vector<1x128xf32>
    %c0_69 = arith.constant 0 : index
    %c0_70 = arith.constant 0 : index
    %304 = vector.load %arg11[%c0_69, %c0_70] : memref<1x128xf32, #tpu.memory_space<vmem>>, vector<1x128xf32>
    tpu.vector_store %arg11[%c0_69, %c0_70], %303 {strides = array<i32>} : memref<1x128xf32, #tpu.memory_space<vmem>>, vector<1x128xf32>,
    %305 = tpu.concatenate %44, %81, %118, %155, %192, %229, %266, %303 in 0 : vector<1x128xf32>, vector<1x128xf32>, vector<1x128xf32>, vector<1x128xf32>, vector<1x128xf32>, vector<1x128xf32>, vector<1x128xf32>, vector<1x128xf32> -> vector<8x128xf32>
    %306 = arith.truncf %305 : vector<8x128xf32> to vector<8x128xbf16>
    %c0_71 = arith.constant 0 : index
    %c0_72 = arith.constant 0 : index
    %307 = vector.load %arg8[%c0_71, %c0_72] : memref<128x256xbf16, #tpu.memory_space<vmem>>, vector<128x256xbf16>
    %cst_73 = arith.constant dense<0.000000e+00> : vector<8x256xf32>
    %308 = tpu.matmul %306, %307, %cst_73 {dimension_numbers = #tpu.dot_dimension_numbers<[1], [0], [0], [1], [0, 0, 1, 1], [], []>} : vector<8x128xbf16>, vector<128x256xbf16>, vector<8x256xf32> -> vector<8x256xf32>
    %c0_74 = arith.constant 0 : index
    %c0_75 = arith.constant 0 : index
    %309 = vector.load %arg9[%c0_74, %c0_75] : memref<1x256xf32, #tpu.memory_space<vmem>>, vector<1x256xf32>
    %310 = vector.broadcast %309 : vector<1x256xf32> to vector<8x256xf32>
    %311 = arith.addf %308, %310 : vector<8x256xf32>
    %cst_76 = arith.constant dense<0xFF800000> : vector<8xf32>
    %312 = vector.multi_reduction <maximumf>, %311, %cst_76 [1] : vector<8x256xf32> to vector<8xf32>
    %313 = vector.shape_cast %312 : vector<8xf32> to vector<8x1xf32>
    %314 = vector.broadcast %313 : vector<8x1xf32> to vector<8x256xf32>
    %315 = arith.subf %311, %314 : vector<8x256xf32>
    %316 = math.exp %315 : vector<8x256xf32>
    %cst_77 = arith.constant dense<0.000000e+00> : vector<8xf32>
    %317 = vector.multi_reduction <add>, %316, %cst_77 [1] : vector<8x256xf32> to vector<8xf32>
    %318 = vector.shape_cast %317 : vector<8xf32> to vector<8x1xf32>
    %319 = math.log %318 : vector<8x1xf32>
    %320 = arith.addf %319, %313 : vector<8x1xf32>
    %321 = vector.broadcast %320 : vector<8x1xf32> to vector<8x256xf32>
    %322 = arith.subf %311, %321 : vector<8x256xf32>
    %c0_78 = arith.constant 0 : index
    %c0_79 = arith.constant 0 : index
    %323 = vector.load %arg10[%c0_78, %c0_79] : memref<8x256xf32, #tpu.memory_space<vmem>>, vector<8x256xf32>
    tpu.vector_store %arg10[%c0_78, %c0_79], %322 {strides = array<i32>} : memref<8x256xf32, #tpu.memory_space<vmem>>, vector<8x256xf32>,
    return
  }
  func.func @transform_0(%arg0: i32, %arg1: memref<8xi32, #tpu.memory_space<smem>>) -> (i32, i32) {
    %c0_i32 = arith.constant 0 : i32
    %c0_i32_0 = arith.constant 0 : i32
    %c0_i32_1 = arith.constant 0 : i32
    return %c0_i32, %c0_i32_0 : i32, i32
  }
  func.func @transform_1(%arg0: i32, %arg1: memref<8xi32, #tpu.memory_space<smem>>) -> (i32, i32) {
    %c0_i32 = arith.constant 0 : i32
    %c0_i32_0 = arith.constant 0 : i32
    %c0_i32_1 = arith.constant 0 : i32
    return %c0_i32, %c0_i32_0 : i32, i32
  }
  func.func @transform_2(%arg0: i32, %arg1: memref<8xi32, #tpu.memory_space<smem>>) -> (i32, i32) {
    %c0_i32 = arith.constant 0 : i32
    %c0_i32_0 = arith.constant 0 : i32
    %c0_i32_1 = arith.constant 0 : i32
    return %c0_i32, %c0_i32_0 : i32, i32
  }
  func.func @transform_3(%arg0: i32, %arg1: memref<8xi32, #tpu.memory_space<smem>>) -> (i32, i32) {
    %c0_i32 = arith.constant 0 : i32
    %c0_i32_0 = arith.constant 0 : i32
    %c0_i32_1 = arith.constant 0 : i32
    return %c0_i32, %c0_i32_0 : i32, i32
  }
  func.func @transform_4(%arg0: i32, %arg1: memref<8xi32, #tpu.memory_space<smem>>) -> (i32, i32) {
    %c0_i32 = arith.constant 0 : i32
    %c0_i32_0 = arith.constant 0 : i32
    %c0_i32_1 = arith.constant 0 : i32
    return %c0_i32, %c0_i32_0 : i32, i32
  }
  func.func @transform_5(%arg0: i32, %arg1: memref<8xi32, #tpu.memory_space<smem>>) -> (i32, i32) {
    %c0_i32 = arith.constant 0 : i32
    %c0_i32_0 = arith.constant 0 : i32
    %c0_i32_1 = arith.constant 0 : i32
    return %c0_i32, %c0_i32_0 : i32, i32
  }
  func.func @transform_6(%arg0: i32, %arg1: memref<8xi32, #tpu.memory_space<smem>>) -> (i32, i32) {
    %c0_i32 = arith.constant 0 : i32
    %c0_i32_0 = arith.constant 0 : i32
    %c0_i32_1 = arith.constant 0 : i32
    return %c0_i32, %c0_i32_0 : i32, i32
  }
  func.func @transform_7(%arg0: i32, %arg1: memref<8xi32, #tpu.memory_space<smem>>) -> (i32, i32) {
    %c0_i32 = arith.constant 0 : i32
    %c0_i32_0 = arith.constant 0 : i32
    %c0_i32_1 = arith.constant 0 : i32
    return %c0_i32, %c0_i32_0 : i32, i32
  }
  func.func @transform_8(%arg0: i32, %arg1: memref<8xi32, #tpu.memory_space<smem>>) -> (i32, i32) {
    %c0_i32 = arith.constant 0 : i32
    %c0_i32_0 = arith.constant 0 : i32
    %c0_i32_1 = arith.constant 0 : i32
    return %c0_i32, %c0_i32_0 : i32, i32
  }
  func.func @transform_9(%arg0: i32, %arg1: memref<8xi32, #tpu.memory_space<smem>>) -> (i32, i32) {
    %c0_i32 = arith.constant 0 : i32
    %c0_i32_0 = arith.constant 0 : i32
    %c0_i32_1 = arith.constant 0 : i32
    return %c0_i32, %c0_i32_0 : i32, i32
  }
}

</mosaic_0001>

<llo_original>
// kernel: decoder_forward.1
$region0: #{decoder_forward.1}
  #allocation0 [shape = 'u32[]', space=smem, size = 0x4, offset = 0x4, fixed_abs, tag = 'smem constant byte address 0x4 - core index']
  #allocation1 [shape = 'u32[72,128]{1,0:T(1,128)}', space=vmem, size = 0x9000, scoped, tag = 'internal scratch']
  #allocation2 [shape = 'f32[256,128]{1,0:T(8,128)}', space=vmem, size = 0x20000, scoped, tag = 'scratch operand']
  #allocation3 [shape = 's32[1]{0}', space=sflag, size = 0x4, scoped, tag = 'scoped memory for decoder_forward.1']
  #allocation4 [shape = 'u8[512]{0}', space=smem, size = 0x200, scoped, tag = 'prefetched SMEM operand 0']
  %s0 = inlined_call_operand.hbm [shape: s32[8], index: 0, kind: input, shape index: {}]
  %s1 = inlined_call_operand.hbm [shape: f32[1,128], index: 1, kind: input, shape index: {}]
  %s2 = inlined_call_operand.hbm [shape: bf16[256,128], index: 2, kind: input, shape index: {}]
  %s3 = inlined_call_operand.hbm [shape: bf16[128,384], index: 3, kind: input, shape index: {}]
  %s4 = inlined_call_operand.vmem [shape: f32[1,384], index: 4, kind: input, shape index: {}]
  %s5 = inlined_call_operand.hbm [shape: bf16[128,384], index: 5, kind: input, shape index: {}]
  %s6 = inlined_call_operand.hbm [shape: f32[1,384], index: 6, kind: input, shape index: {}]
  %s7 = inlined_call_operand.hbm [shape: bf16[128,256], index: 7, kind: input, shape index: {}]
  %s8 = inlined_call_operand.vmem [shape: f32[1,256], index: 8, kind: input, shape index: {}]
  %s9 = inlined_call_operand.hbm [shape: f32[8,256], index: 9, kind: output, shape index: {0}]
  %s10 = inlined_call_operand.hbm [shape: f32[1,128], index: 10, kind: output, shape index: {1}]
  %11 = xla_tuple %s9, %s10
  %s12 = sld [smem:[#allocation0]]
  $region74: #{decoder_forward.1} parent=0
    _
  %s14 = ssub.s32 1, %s12
  %s15 = scalar_select 0, %s14, %s12
  %s17 = sshll.u32 %s0, 4
  %s18 = int_to_ptr.hbm [resolvable:$true] %s17
  %20 = dma.hbm_to_smem %s18, 16, [#allocation4], [#allocation3]
  %22 = dma.done [#allocation3], 16
  %23 = sfence
  $region1: #{decoder_forward.1} parent=0
    #allocation5 [shape = 'u8[512]{0}', space=vmem, size = 0x400, scoped, tag = 'input window, operand 1, single buffered']
    #allocation6 [shape = 's32[1]{0}', space=sflag, size = 0x4, scoped, tag = 'scoped memory for decoder_forward.1']
    #allocation7 [shape = 's32[1]{0}', space=sflag, size = 0x4, scoped, tag = 'scoped memory for decoder_forward.1']
    #allocation8 [shape = 'u8[65536]{0}', space=vmem, size = 0x10000, scoped, tag = 'input window, operand 2, single buffered']
    #allocation9 [shape = 's32[1]{0}', space=sflag, size = 0x4, scoped, tag = 'scoped memory for decoder_forward.1']
    #allocation10 [shape = 'u8[98304]{0}', space=vmem, size = 0x18000, scoped, tag = 'input window, operand 3, single buffered']
    #allocation11 [shape = 'u8[98304]{0}', space=vmem, size = 0x18000, scoped, tag = 'input window, operand 5, single buffered']
    #allocation12 [shape = 's32[1]{0}', space=sflag, size = 0x4, scoped, tag = 'scoped memory for decoder_forward.1']
    #allocation13 [shape = 'u8[1536]{0}', space=vmem, size = 0x800, scoped, tag = 'input window, operand 6, single buffered']
    #allocation14 [shape = 'u8[65536]{0}', space=vmem, size = 0x10000, scoped, tag = 'input window, operand 7, single buffered']
    #allocation15 [shape = 's32[1]{0}', space=sflag, size = 0x4, scoped, tag = 'scoped memory for decoder_forward.1']
    #allocation16 [shape = 'u8[8192]{0}', space=vmem, size = 0x2000, scoped, tag = 'output window, operand 0, single buffered']
    #allocation17 [shape = 'u8[512]{0}', space=vmem, size = 0x400, scoped, tag = 'output window, operand 1, single buffered']
    #allocation18 [shape = 's32[1]{0}', space=sflag, size = 0x4, scoped, tag = 'scoped memory for decoder_forward.1']
    %24 = vsyncpa [#allocation6], 0
    %25 = vsyncpa [#allocation9], 0
    %26 = vsyncpa [#allocation12], 0
    %27 = vsyncpa [#allocation15], 0
    %28 = vsyncpa [#allocation7], 0
    %29 = vsyncpa [#allocation18], 0
    // Predicated region
    $region2: #{decoder_forward.1} parent=1 // pred_check
      _
    $region3: #{decoder_forward.1} parent=1 // pred_check_branch
      %31 = sbr.rel (0) target = $region5
    $region4: #{decoder_forward.1} parent=1 // pred_region
      %33 = vsyncadd [#allocation6], 0
      %s35 = sshll.u32 %s1, 4
      %s36 = int_to_ptr.hbm [resolvable:$true] %s35
      %s37 = sshll.u32 [#allocation5], 4
      %s38 = int_to_ptr.vmem [resolvable:$true] %s37
      %40 = dma.hbm_to_vmem [thread:$0]  %s36, 16, %s38, [#allocation6]
    $region5: #{decoder_forward.1} parent=1 // pred_fallthru
      _
    // Predicated region
    $region6: #{decoder_forward.1} parent=1 // pred_check
      _
    $region7: #{decoder_forward.1} parent=1 // pred_check_branch
      %42 = sbr.rel (0) target = $region9
    $region8: #{decoder_forward.1} parent=1 // pred_region
      %44 = vsyncadd [#allocation9], 0
      %s45 = sshll.u32 %s2, 4
      %s46 = int_to_ptr.hbm [resolvable:$true] %s45
      %s47 = sshll.u32 [#allocation8], 4
      %s48 = int_to_ptr.vmem [resolvable:$true] %s47
      %53 = dma.hbm_to_vmem [thread:$0]  %s46, 2048, %s48, [#allocation9], 64, 64, 4
    $region9: #{decoder_forward.1} parent=1 // pred_fallthru
      _
    // Predicated region
    $region10: #{decoder_forward.1} parent=1 // pred_check
      _
    $region11: #{decoder_forward.1} parent=1 // pred_check_branch
      %55 = sbr.rel (0) target = $region13
    $region12: #{decoder_forward.1} parent=1 // pred_region
      %57 = vsyncadd [#allocation9], 0
      %s58 = sshll.u32 %s3, 4
      %s59 = int_to_ptr.hbm [resolvable:$true] %s58
      %s60 = sshll.u32 [#allocation10], 4
      %s61 = int_to_ptr.vmem [resolvable:$true] %s60
      %66 = dma.hbm_to_vmem [thread:$0]  %s59, 3072, %s61, [#allocation9], 192, 192, 12
    $region13: #{decoder_forward.1} parent=1 // pred_fallthru
      _
    // Predicated region
    $region14: #{decoder_forward.1} parent=1 // pred_check
      _
    $region15: #{decoder_forward.1} parent=1 // pred_check_branch
      %68 = sbr.rel (0) target = $region17
    $region16: #{decoder_forward.1} parent=1 // pred_region
      _
    $region17: #{decoder_forward.1} parent=1 // pred_fallthru
      _
    // Predicated region
    $region18: #{decoder_forward.1} parent=1 // pred_check
      _
    $region19: #{decoder_forward.1} parent=1 // pred_check_branch
      %70 = sbr.rel (0) target = $region21
    $region20: #{decoder_forward.1} parent=1 // pred_region
      %72 = vsyncadd [#allocation12], 0
      %s73 = sshll.u32 %s5, 4
      %s74 = int_to_ptr.hbm [resolvable:$true] %s73
      %s75 = sshll.u32 [#allocation11], 4
      %s76 = int_to_ptr.vmem [resolvable:$true] %s75
      %81 = dma.hbm_to_vmem [thread:$0]  %s74, 3072, %s76, [#allocation12], 192, 192, 12
    $region21: #{decoder_forward.1} parent=1 // pred_fallthru
      _
    // Predicated region
    $region22: #{decoder_forward.1} parent=1 // pred_check
      _
    $region23: #{decoder_forward.1} parent=1 // pred_check_branch
      %83 = sbr.rel (0) target = $region25
    $region24: #{decoder_forward.1} parent=1 // pred_region
      %85 = vsyncadd [#allocation12], 0
      %s87 = sshll.u32 %s6, 4
      %s88 = int_to_ptr.hbm [resolvable:$true] %s87
      %s89 = sshll.u32 [#allocation13], 4
      %s90 = int_to_ptr.vmem [resolvable:$true] %s89
      %92 = dma.hbm_to_vmem [thread:$0]  %s88, 48, %s90, [#allocation12]
    $region25: #{decoder_forward.1} parent=1 // pred_fallthru
      _
    // Predicated region
    $region26: #{decoder_forward.1} parent=1 // pred_check
      _
    $region27: #{decoder_forward.1} parent=1 // pred_check_branch
      %94 = sbr.rel (0) target = $region29
    $region28: #{decoder_forward.1} parent=1 // pred_region
      %96 = vsyncadd [#allocation15], 0
      %s97 = sshll.u32 %s7, 4
      %s98 = int_to_ptr.hbm [resolvable:$true] %s97
      %s99 = sshll.u32 [#allocation14], 4
      %s100 = int_to_ptr.vmem [resolvable:$true] %s99
      %105 = dma.hbm_to_vmem [thread:$0]  %s98, 2048, %s100, [#allocation15], 128, 128, 8
    $region29: #{decoder_forward.1} parent=1 // pred_fallthru
      _
    // Predicated region
    $region30: #{decoder_forward.1} parent=1 // pred_check
      _
    $region31: #{decoder_forward.1} parent=1 // pred_check_branch
      %107 = sbr.rel (0) target = $region33
    $region32: #{decoder_forward.1} parent=1 // pred_region
      _
    $region33: #{decoder_forward.1} parent=1 // pred_fallthru
      _
    // Predicated region
    $region34: #{decoder_forward.1} parent=1 // pred_check
      _
    $region35: #{decoder_forward.1} parent=1 // pred_check_branch
      %109 = sbr.rel (0) target = $region37
    $region36: #{decoder_forward.1} parent=1 // pred_region
      %111 = dma.done [#allocation6], 16
    $region37: #{decoder_forward.1} parent=1 // pred_fallthru
      _
    // Predicated region
    $region38: #{decoder_forward.1} parent=1 // pred_check
      _
    $region39: #{decoder_forward.1} parent=1 // pred_check_branch
      %113 = sbr.rel (0) target = $region41
    $region40: #{decoder_forward.1} parent=1 // pred_region
      %115 = dma.done [#allocation9], 2048
    $region41: #{decoder_forward.1} parent=1 // pred_fallthru
      _
    // Predicated region
    $region42: #{decoder_forward.1} parent=1 // pred_check
      _
    $region43: #{decoder_forward.1} parent=1 // pred_check_branch
      %117 = sbr.rel (0) target = $region45
    $region44: #{decoder_forward.1} parent=1 // pred_region
      %119 = dma.done [#allocation9], 3072
    $region45: #{decoder_forward.1} parent=1 // pred_fallthru
      _
    // Predicated region
    $region46: #{decoder_forward.1} parent=1 // pred_check
      _
    $region47: #{decoder_forward.1} parent=1 // pred_check_branch
      %121 = sbr.rel (0) target = $region49
    $region48: #{decoder_forward.1} parent=1 // pred_region
      %123 = dma.done [#allocation12], 3072
    $region49: #{decoder_forward.1} parent=1 // pred_fallthru
      _
    // Predicated region
    $region50: #{decoder_forward.1} parent=1 // pred_check
      _
    $region51: #{decoder_forward.1} parent=1 // pred_check_branch
      %125 = sbr.rel (0) target = $region53
    $region52: #{decoder_forward.1} parent=1 // pred_region
      %127 = dma.done [#allocation12], 48
    $region53: #{decoder_forward.1} parent=1 // pred_fallthru
      _
    // Predicated region
    $region54: #{decoder_forward.1} parent=1 // pred_check
      _
    $region55: #{decoder_forward.1} parent=1 // pred_check_branch
      %129 = sbr.rel (0) target = $region57
    $region56: #{decoder_forward.1} parent=1 // pred_region
      %131 = dma.done [#allocation15], 2048
    $region57: #{decoder_forward.1} parent=1 // pred_fallthru
      _
    %v132 = vld [vmem:[#allocation8] sm:$0xf]
    %v133 = vld [vmem:[#allocation8 + $0x4] sm:$0xf]
    %v134 = vld [vmem:[#allocation8 + $0x8] sm:$0xf]
    %v135 = vld [vmem:[#allocation8 + $0xc] sm:$0xf]
    %v136 = vld [vmem:[#allocation8 + $0x10] sm:$0xf]
    %v137 = vld [vmem:[#allocation8 + $0x14] sm:$0xf]
    %v138 = vld [vmem:[#allocation8 + $0x18] sm:$0xf]
    %v139 = vld [vmem:[#allocation8 + $0x1c] sm:$0xf]
    %v140 = vld [vmem:[#allocation8 + $0x20] sm:$0xf]
    %v141 = vld [vmem:[#allocation8 + $0x24] sm:$0xf]
    %v142 = vld [vmem:[#allocation8 + $0x28] sm:$0xf]
    %v143 = vld [vmem:[#allocation8 + $0x2c] sm:$0xf]
    %v144 = vld [vmem:[#allocation8 + $0x30] sm:$0xf]
    %v145 = vld [vmem:[#allocation8 + $0x34] sm:$0xf]
    %v146 = vld [vmem:[#allocation8 + $0x38] sm:$0xf]
    %v147 = vld [vmem:[#allocation8 + $0x3c] sm:$0xf]
    %v148 = vld [vmem:[#allocation8 + $0x40] sm:$0xf]
    %v149 = vld [vmem:[#allocation8 + $0x44] sm:$0xf]
    %v150 = vld [vmem:[#allocation8 + $0x48] sm:$0xf]
    %v151 = vld [vmem:[#allocation8 + $0x4c] sm:$0xf]
    %v152 = vld [vmem:[#allocation8 + $0x50] sm:$0xf]
    %v153 = vld [vmem:[#allocation8 + $0x54] sm:$0xf]
    %v154 = vld [vmem:[#allocation8 + $0x58] sm:$0xf]
    %v155 = vld [vmem:[#allocation8 + $0x5c] sm:$0xf]
    %v156 = vld [vmem:[#allocation8 + $0x60] sm:$0xf]
    %v157 = vld [vmem:[#allocation8 + $0x64] sm:$0xf]
    %v158 = vld [vmem:[#allocation8 + $0x68] sm:$0xf]
    %v159 = vld [vmem:[#allocation8 + $0x6c] sm:$0xf]
    %v160 = vld [vmem:[#allocation8 + $0x70] sm:$0xf]
    %v161 = vld [vmem:[#allocation8 + $0x74] sm:$0xf]
    %v162 = vld [vmem:[#allocation8 + $0x78] sm:$0xf]
    %v163 = vld [vmem:[#allocation8 + $0x7c] sm:$0xf]
    %v164 = vunpack.c.l.bf16 %v132
    %v165 = vunpack.c.l.bf16 %v133
    %v166 = vunpack.c.l.bf16 %v134
    %v167 = vunpack.c.l.bf16 %v135
    %v168 = vunpack.c.l.bf16 %v136
    %v169 = vunpack.c.l.bf16 %v137
    %v170 = vunpack.c.l.bf16 %v138
    %v171 = vunpack.c.l.bf16 %v139
    %v172 = vunpack.c.l.bf16 %v140
    %v173 = vunpack.c.l.bf16 %v141
    %v174 = vunpack.c.l.bf16 %v142
    %v175 = vunpack.c.l.bf16 %v143
    %v176 = vunpack.c.l.bf16 %v144
    %v177 = vunpack.c.l.bf16 %v145
    %v178 = vunpack.c.l.bf16 %v146
    %v179 = vunpack.c.l.bf16 %v147
    %v180 = vunpack.c.l.bf16 %v148
    %v181 = vunpack.c.l.bf16 %v149
    %v182 = vunpack.c.l.bf16 %v150
    %v183 = vunpack.c.l.bf16 %v151
    %v184 = vunpack.c.l.bf16 %v152
    %v185 = vunpack.c.l.bf16 %v153
    %v186 = vunpack.c.l.bf16 %v154
    %v187 = vunpack.c.l.bf16 %v155
    %v188 = vunpack.c.l.bf16 %v156
    %v189 = vunpack.c.l.bf16 %v157
    %v190 = vunpack.c.l.bf16 %v158
    %v191 = vunpack.c.l.bf16 %v159
    %v192 = vunpack.c.l.bf16 %v160
    %v193 = vunpack.c.l.bf16 %v161
    %v194 = vunpack.c.l.bf16 %v162
    %v195 = vunpack.c.l.bf16 %v163
    %196 = vst [vmem:[#allocation2] sm:$0xff] %v164
    %197 = vst [vmem:[#allocation2 + $0x8] sm:$0xff] %v165
    %198 = vst [vmem:[#allocation2 + $0x10] sm:$0xff] %v166
    %199 = vst [vmem:[#allocation2 + $0x18] sm:$0xff] %v167
    %200 = vst [vmem:[#allocation2 + $0x20] sm:$0xff] %v168
    %201 = vst [vmem:[#allocation2 + $0x28] sm:$0xff] %v169
    %202 = vst [vmem:[#allocation2 + $0x30] sm:$0xff] %v170
    %203 = vst [vmem:[#allocation2 + $0x38] sm:$0xff] %v171
    %204 = vst [vmem:[#allocation2 + $0x40] sm:$0xff] %v172
    %205 = vst [vmem:[#allocation2 + $0x48] sm:$0xff] %v173
    %206 = vst [vmem:[#allocation2 + $0x50] sm:$0xff] %v174
    %207 = vst [vmem:[#allocation2 + $0x58] sm:$0xff] %v175
    %208 = vst [vmem:[#allocation2 + $0x60] sm:$0xff] %v176
    %209 = vst [vmem:[#allocation2 + $0x68] sm:$0xff] %v177
    %210 = vst [vmem:[#allocation2 + $0x70] sm:$0xff] %v178
    %211 = vst [vmem:[#allocation2 + $0x78] sm:$0xff] %v179
    %212 = vst [vmem:[#allocation2 + $0x80] sm:$0xff] %v180
    %213 = vst [vmem:[#allocation2 + $0x88] sm:$0xff] %v181
    %214 = vst [vmem:[#allocation2 + $0x90] sm:$0xff] %v182
    %215 = vst [vmem:[#allocation2 + $0x98] sm:$0xff] %v183
    %216 = vst [vmem:[#allocation2 + $0xa0] sm:$0xff] %v184
    %217 = vst [vmem:[#allocation2 + $0xa8] sm:$0xff] %v185
    %218 = vst [vmem:[#allocation2 + $0xb0] sm:$0xff] %v186
    %219 = vst [vmem:[#allocation2 + $0xb8] sm:$0xff] %v187
    %220 = vst [vmem:[#allocation2 + $0xc0] sm:$0xff] %v188
    %221 = vst [vmem:[#allocation2 + $0xc8] sm:$0xff] %v189
    %222 = vst [vmem:[#allocation2 + $0xd0] sm:$0xff] %v190
    %223 = vst [vmem:[#allocation2 + $0xd8] sm:$0xff] %v191
    %224 = vst [vmem:[#allocation2 + $0xe0] sm:$0xff] %v192
    %225 = vst [vmem:[#allocation2 + $0xe8] sm:$0xff] %v193
    %226 = vst [vmem:[#allocation2 + $0xf0] sm:$0xff] %v194
    %227 = vst [vmem:[#allocation2 + $0xf8] sm:$0xff] %v195
    %v228 = vld [vmem:[#allocation10] sm:$0xff]
    %v229 = vld [vmem:[#allocation10 + $0x8] sm:$0xf]
    %v230 = vld [vmem:[#allocation10 + $0xc] sm:$0xff]
    %v231 = vld [vmem:[#allocation10 + $0x14] sm:$0xf]
    %v232 = vld [vmem:[#allocation10 + $0x18] sm:$0xff]
    %v233 = vld [vmem:[#allocation10 + $0x20] sm:$0xf]
    %v234 = vld [vmem:[#allocation10 + $0x24] sm:$0xff]
    %v235 = vld [vmem:[#allocation10 + $0x2c] sm:$0xf]
    %v236 = vld [vmem:[#allocation10 + $0x30] sm:$0xff]
    %v237 = vld [vmem:[#allocation10 + $0x38] sm:$0xf]
    %v238 = vld [vmem:[#allocation10 + $0x3c] sm:$0xff]
    %v239 = vld [vmem:[#allocation10 + $0x44] sm:$0xf]
    %v240 = vld [vmem:[#allocation10 + $0x48] sm:$0xff]
    %v241 = vld [vmem:[#allocation10 + $0x50] sm:$0xf]
    %v242 = vld [vmem:[#allocation10 + $0x54] sm:$0xff]
    %v243 = vld [vmem:[#allocation10 + $0x5c] sm:$0xf]
    %v244 = vld [vmem:[#allocation10 + $0x60] sm:$0xff]
    %v245 = vld [vmem:[#allocation10 + $0x68] sm:$0xf]
    %v246 = vld [vmem:[#allocation10 + $0x6c] sm:$0xff]
    %v247 = vld [vmem:[#allocation10 + $0x74] sm:$0xf]
    %v248 = vld [vmem:[#allocation10 + $0x78] sm:$0xff]
    %v249 = vld [vmem:[#allocation10 + $0x80] sm:$0xf]
    %v250 = vld [vmem:[#allocation10 + $0x84] sm:$0xff]
    %v251 = vld [vmem:[#allocation10 + $0x8c] sm:$0xf]
    %v252 = vld [vmem:[#allocation10 + $0x90] sm:$0xff]
    %v253 = vld [vmem:[#allocation10 + $0x98] sm:$0xf]
    %v254 = vld [vmem:[#allocation10 + $0x9c] sm:$0xff]
    %v255 = vld [vmem:[#allocation10 + $0xa4] sm:$0xf]
    %v256 = vld [vmem:[#allocation10 + $0xa8] sm:$0xff]
    %v257 = vld [vmem:[#allocation10 + $0xb0] sm:$0xf]
    %v258 = vld [vmem:[#allocation10 + $0xb4] sm:$0xff]
    %v259 = vld [vmem:[#allocation10 + $0xbc] sm:$0xf]
    %v260 = vld [vmem:[#allocation11] sm:$0xff]
    %v261 = vld [vmem:[#allocation11 + $0x8] sm:$0xf]
    %v262 = vld [vmem:[#allocation11 + $0xc] sm:$0xff]
    %v263 = vld [vmem:[#allocation11 + $0x14] sm:$0xf]
    %v264 = vld [vmem:[#allocation11 + $0x18] sm:$0xff]
    %v265 = vld [vmem:[#allocation11 + $0x20] sm:$0xf]
    %v266 = vld [vmem:[#allocation11 + $0x24] sm:$0xff]
    %v267 = vld [vmem:[#allocation11 + $0x2c] sm:$0xf]
    %v268 = vld [vmem:[#allocation11 + $0x30] sm:$0xff]
    %v269 = vld [vmem:[#allocation11 + $0x38] sm:$0xf]
    %v270 = vld [vmem:[#allocation11 + $0x3c] sm:$0xff]
    %v271 = vld [vmem:[#allocation11 + $0x44] sm:$0xf]
    %v272 = vld [vmem:[#allocation11 + $0x48] sm:$0xff]
    %v273 = vld [vmem:[#allocation11 + $0x50] sm:$0xf]
    %v274 = vld [vmem:[#allocation11 + $0x54] sm:$0xff]
    %v275 = vld [vmem:[#allocation11 + $0x5c] sm:$0xf]
    %v276 = vld [vmem:[#allocation11 + $0x60] sm:$0xff]
    %v277 = vld [vmem:[#allocation11 + $0x68] sm:$0xf]
    %v278 = vld [vmem:[#allocation11 + $0x6c] sm:$0xff]
    %v279 = vld [vmem:[#allocation11 + $0x74] sm:$0xf]
    %v280 = vld [vmem:[#allocation11 + $0x78] sm:$0xff]
    %v281 = vld [vmem:[#allocation11 + $0x80] sm:$0xf]
    %v282 = vld [vmem:[#allocation11 + $0x84] sm:$0xff]
    %v283 = vld [vmem:[#allocation11 + $0x8c] sm:$0xf]
    %v284 = vld [vmem:[#allocation11 + $0x90] sm:$0xff]
    %v285 = vld [vmem:[#allocation11 + $0x98] sm:$0xf]
    %v286 = vld [vmem:[#allocation11 + $0x9c] sm:$0xff]
    %v287 = vld [vmem:[#allocation11 + $0xa4] sm:$0xf]
    %v288 = vld [vmem:[#allocation11 + $0xa8] sm:$0xff]
    %v289 = vld [vmem:[#allocation11 + $0xb0] sm:$0xf]
    %v290 = vld [vmem:[#allocation11 + $0xb4] sm:$0xff]
    %v291 = vld [vmem:[#allocation11 + $0xbc] sm:$0xf]
    %v292 = vld [vmem:[%s4] sm:$0x7]
    %v293 = vld [vmem:[#allocation13] sm:$0x7]
    %v294 = vld [vmem:[#allocation5] sm:$0x1]
    %s295 = sld [smem:[#allocation4]]
    %s296 = scalar_lea.vmem [#allocation2], %s295
    %v297 = vld [vmem:[%s296] sm:$0x1]
    %v298 = vmax.f32 %v297, 0.0
    %v299 = vpack.c.bf16 %v298, %v298
    %v332 = vunpack.c.l.b16 %v228
    %v333 = vunpack.c.h.b16 %v228
    %v334 = vunpack.c.l.b16 %v229
    %v335 = vunpack.c.l.b16 %v230
    %v336 = vunpack.c.h.b16 %v230
    %v337 = vunpack.c.l.b16 %v231
    %v338 = vunpack.c.l.b16 %v232
    %v339 = vunpack.c.h.b16 %v232
    %v340 = vunpack.c.l.b16 %v233
    %v341 = vunpack.c.l.b16 %v234
    %v342 = vunpack.c.h.b16 %v234
    %v343 = vunpack.c.l.b16 %v235
    %v344 = vunpack.c.l.b16 %v236
    %v345 = vunpack.c.h.b16 %v236
    %v346 = vunpack.c.l.b16 %v237
    %v347 = vunpack.c.l.b16 %v238
    %v348 = vunpack.c.h.b16 %v238
    %v349 = vunpack.c.l.b16 %v239
    %v350 = vunpack.c.l.b16 %v240
    %v351 = vunpack.c.h.b16 %v240
    %v352 = vunpack.c.l.b16 %v241
    %v353 = vunpack.c.l.b16 %v242
    %v354 = vunpack.c.h.b16 %v242
    %v355 = vunpack.c.l.b16 %v243
    %v356 = vunpack.c.l.b16 %v244
    %v357 = vunpack.c.h.b16 %v244
    %v358 = vunpack.c.l.b16 %v245
    %v359 = vunpack.c.l.b16 %v246
    %v360 = vunpack.c.h.b16 %v246
    %v361 = vunpack.c.l.b16 %v247
    %v362 = vunpack.c.l.b16 %v248
    %v363 = vunpack.c.h.b16 %v248
    %v364 = vunpack.c.l.b16 %v249
    %v365 = vunpack.c.l.b16 %v250
    %v366 = vunpack.c.h.b16 %v250
    %v367 = vunpack.c.l.b16 %v251
    %v368 = vunpack.c.l.b16 %v252
    %v369 = vunpack.c.h.b16 %v252
    %v370 = vunpack.c.l.b16 %v253
    %v371 = vunpack.c.l.b16 %v254
    %v372 = vunpack.c.h.b16 %v254
    %v373 = vunpack.c.l.b16 %v255
    %v374 = vunpack.c.l.b16 %v256
    %v375 = vunpack.c.h.b16 %v256
    %v376 = vunpack.c.l.b16 %v257
    %v377 = vunpack.c.l.b16 %v258
    %v378 = vunpack.c.h.b16 %v258
    %v379 = vunpack.c.l.b16 %v259
    %v380 = vpack.c.b16 %v335, %v332
    %v381 = vpack.c.b16 %v336, %v333
    %v382 = vpack.c.b16 %v337, %v334
    %v383 = vpack.c.b16 %v341, %v338
    %v384 = vpack.c.b16 %v342, %v339
    %v385 = vpack.c.b16 %v343, %v340
    %v386 = vpack.c.b16 %v347, %v344
    %v387 = vpack.c.b16 %v348, %v345
    %v388 = vpack.c.b16 %v349, %v346
    %v389 = vpack.c.b16 %v353, %v350
    %v390 = vpack.c.b16 %v354, %v351
    %v391 = vpack.c.b16 %v355, %v352
    %v392 = vpack.c.b16 %v359, %v356
    %v393 = vpack.c.b16 %v360, %v357
    %v394 = vpack.c.b16 %v361, %v358
    %v395 = vpack.c.b16 %v365, %v362
    %v396 = vpack.c.b16 %v366, %v363
    %v397 = vpack.c.b16 %v367, %v364
    %v398 = vpack.c.b16 %v371, %v368
    %v399 = vpack.c.b16 %v372, %v369
    %v400 = vpack.c.b16 %v373, %v370
    %v401 = vpack.c.b16 %v377, %v374
    %v402 = vpack.c.b16 %v378, %v375
    %v403 = vpack.c.b16 %v379, %v376
    %v429 = vperm.slane %v292, 0
    %v430 = vperm.slane %v292, 1
    %v431 = vperm.slane %v292, 2
    %435 = vmatpush.bf16.msra.mxu0 %v401
    %436 = vmatpush.bf16.msra.mxu0 %v398
    %437 = vmatpush.bf16.msra.mxu0 %v395
    %438 = vmatpush.bf16.msra.mxu0 %v392
    %439 = vmatpush.bf16.msra.mxu0 %v389
    %440 = vmatpush.bf16.msra.mxu0 %v386
    %441 = vmatpush.bf16.msra.mxu0 %v383
    %442 = vmatpush.bf16.msra.mxu0 %v380
    %443 = vmatmul.bf16.gmra.mxu0 %v299
    %v444 = vpop.f32.mrf.mxu0
    %v445 = vadd.f32 %v429, %v444
    %v446 = vpop.f32.mrf.mxu0
    %447 = vdwg.mxu0
    %448 = vmatpush.bf16.msra.mxu0 %v402
    %449 = vmatpush.bf16.msra.mxu0 %v399
    %450 = vmatpush.bf16.msra.mxu0 %v396
    %451 = vmatpush.bf16.msra.mxu0 %v393
    %452 = vmatpush.bf16.msra.mxu0 %v390
    %453 = vmatpush.bf16.msra.mxu0 %v387
    %454 = vmatpush.bf16.msra.mxu0 %v384
    %455 = vmatpush.bf16.msra.mxu0 %v381
    %456 = vmatmul.bf16.gmra.mxu0 %v299
    %v457 = vpop.f32.mrf.mxu0
    %v458 = vadd.f32 %v430, %v457
    %v459 = vpop.f32.mrf.mxu0
    %460 = vdwg.mxu0
    %461 = vmatpush.bf16.msra.mxu0 %v403
    %462 = vmatpush.bf16.msra.mxu0 %v400
    %463 = vmatpush.bf16.msra.mxu0 %v397
    %464 = vmatpush.bf16.msra.mxu0 %v394
    %465 = vmatpush.bf16.msra.mxu0 %v391
    %466 = vmatpush.bf16.msra.mxu0 %v388
    %467 = vmatpush.bf16.msra.mxu0 %v385
    %468 = vmatpush.bf16.msra.mxu0 %v382
    %469 = vmatmul.bf16.gmra.mxu0 %v299
    %v470 = vpop.f32.mrf.mxu0
    %v471 = vadd.f32 %v431, %v470
    %v472 = vpop.f32.mrf.mxu0
    %473 = vdwg.mxu0
    %v474 = vpack.c.bf16 %v294, %v294
    %v507 = vunpack.c.l.b16 %v260
    %v508 = vunpack.c.h.b16 %v260
    %v509 = vunpack.c.l.b16 %v261
    %v510 = vunpack.c.l.b16 %v262
    %v511 = vunpack.c.h.b16 %v262
    %v512 = vunpack.c.l.b16 %v263
    %v513 = vunpack.c.l.b16 %v264
    %v514 = vunpack.c.h.b16 %v264
    %v515 = vunpack.c.l.b16 %v265
    %v516 = vunpack.c.l.b16 %v266
    %v517 = vunpack.c.h.b16 %v266
    %v518 = vunpack.c.l.b16 %v267
    %v519 = vunpack.c.l.b16 %v268
    %v520 = vunpack.c.h.b16 %v268
    %v521 = vunpack.c.l.b16 %v269
    %v522 = vunpack.c.l.b16 %v270
    %v523 = vunpack.c.h.b16 %v270
    %v524 = vunpack.c.l.b16 %v271
    %v525 = vunpack.c.l.b16 %v272
    %v526 = vunpack.c.h.b16 %v272
    %v527 = vunpack.c.l.b16 %v273
    %v528 = vunpack.c.l.b16 %v274
    %v529 = vunpack.c.h.b16 %v274
    %v530 = vunpack.c.l.b16 %v275
    %v531 = vunpack.c.l.b16 %v276
    %v532 = vunpack.c.h.b16 %v276
    %v533 = vunpack.c.l.b16 %v277
    %v534 = vunpack.c.l.b16 %v278
    %v535 = vunpack.c.h.b16 %v278
    %v536 = vunpack.c.l.b16 %v279
    %v537 = vunpack.c.l.b16 %v280
    %v538 = vunpack.c.h.b16 %v280
    %v539 = vunpack.c.l.b16 %v281
    %v540 = vunpack.c.l.b16 %v282
    %v541 = vunpack.c.h.b16 %v282
    %v542 = vunpack.c.l.b16 %v283
    %v543 = vunpack.c.l.b16 %v284
    %v544 = vunpack.c.h.b16 %v284
    %v545 = vunpack.c.l.b16 %v285
    %v546 = vunpack.c.l.b16 %v286
    %v547 = vunpack.c.h.b16 %v286
    %v548 = vunpack.c.l.b16 %v287
    %v549 = vunpack.c.l.b16 %v288
    %v550 = vunpack.c.h.b16 %v288
    %v551 = vunpack.c.l.b16 %v289
    %v552 = vunpack.c.l.b16 %v290
    %v553 = vunpack.c.h.b16 %v290
    %v554 = vunpack.c.l.b16 %v291
    %v555 = vpack.c.b16 %v510, %v507
    %v556 = vpack.c.b16 %v511, %v508
    %v557 = vpack.c.b16 %v512, %v509
    %v558 = vpack.c.b16 %v516, %v513
    %v559 = vpack.c.b16 %v517, %v514
    %v560 = vpack.c.b16 %v518, %v515
    %v561 = vpack.c.b16 %v522, %v519
    %v562 = vpack.c.b16 %v523, %v520
    %v563 = vpack.c.b16 %v524, %v521
    %v564 = vpack.c.b16 %v528, %v525
    %v565 = vpack.c.b16 %v529, %v526
    %v566 = vpack.c.b16 %v530, %v527
    %v567 = vpack.c.b16 %v534, %v531
    %v568 = vpack.c.b16 %v535, %v532
    %v569 = vpack.c.b16 %v536, %v533
    %v570 = vpack.c.b16 %v540, %v537
    %v571 = vpack.c.b16 %v541, %v538
    %v572 = vpack.c.b16 %v542, %v539
    %v573 = vpack.c.b16 %v546, %v543
    %v574 = vpack.c.b16 %v547, %v544
    %v575 = vpack.c.b16 %v548, %v545
    %v576 = vpack.c.b16 %v552, %v549
    %v577 = vpack.c.b16 %v553, %v550
    %v578 = vpack.c.b16 %v554, %v551
    %v604 = vperm.slane %v293, 0
    %v605 = vperm.slane %v293, 1
    %v606 = vperm.slane %v293, 2
    %610 = vmatpush.bf16.msra.mxu0 %v576
    %611 = vmatpush.bf16.msra.mxu0 %v573
    %612 = vmatpush.bf16.msra.mxu0 %v570
    %613 = vmatpush.bf16.msra.mxu0 %v567
    %614 = vmatpush.bf16.msra.mxu0 %v564
    %615 = vmatpush.bf16.msra.mxu0 %v561
    %616 = vmatpush.bf16.msra.mxu0 %v558
    %617 = vmatpush.bf16.msra.mxu0 %v555
    %618 = vmatmul.bf16.gmra.mxu0 %v474
    %v619 = vpop.f32.mrf.mxu0
    %v620 = vadd.f32 %v604, %v619
    %v621 = vpop.f32.mrf.mxu0
    %622 = vdwg.mxu0
    %623 = vmatpush.bf16.msra.mxu0 %v577
    %624 = vmatpush.bf16.msra.mxu0 %v574
    %625 = vmatpush.bf16.msra.mxu0 %v571
    %626 = vmatpush.bf16.msra.mxu0 %v568
    %627 = vmatpush.bf16.msra.mxu0 %v565
    %628 = vmatpush.bf16.msra.mxu0 %v562
    %629 = vmatpush.bf16.msra.mxu0 %v559
    %630 = vmatpush.bf16.msra.mxu0 %v556
    %631 = vmatmul.bf16.gmra.mxu0 %v474
    %v632 = vpop.f32.mrf.mxu0
    %v633 = vadd.f32 %v605, %v632
    %v634 = vpop.f32.mrf.mxu0
    %635 = vdwg.mxu0
    %636 = vmatpush.bf16.msra.mxu0 %v578
    %637 = vmatpush.bf16.msra.mxu0 %v575
    %638 = vmatpush.bf16.msra.mxu0 %v572
    %639 = vmatpush.bf16.msra.mxu0 %v569
    %640 = vmatpush.bf16.msra.mxu0 %v566
    %641 = vmatpush.bf16.msra.mxu0 %v563
    %642 = vmatpush.bf16.msra.mxu0 %v560
    %643 = vmatpush.bf16.msra.mxu0 %v557
    %644 = vmatmul.bf16.gmra.mxu0 %v474
    %v645 = vpop.f32.mrf.mxu0
    %v646 = vadd.f32 %v606, %v645
    %v647 = vpop.f32.mrf.mxu0
    %648 = vdwg.mxu0
    %v649 = vadd.f32 %v445, %v620
    %v650 = vxor.u32 %v649, 2147483648
    %v651 = vmul.f32 %v650, 1.442695
    %v652 = vpow.pop %v651
    %v653 = vadd.f32 %v652, 1.0
    %v654 = vrcp.pop %v653
    %v655 = vmul.f32 %v653, %v654
    %v656 = vsub.f32 1.0, %v655
    %v657 = vmul.f32 %v654, %v656
    %v658 = vadd.f32 %v654, %v657
    %vm659 = vweird.f32 %v653
    %vm660 = vweird.f32 %v654
    %vm661 = vmor %vm659, %vm660
    %v662 = vsel %vm661, %v654, %v658
    %v663 = vand.u32 2147483647, %v653
    %vm664 = vcmp.eq.f32.partialorder %v663, 8.507059e+37
    %v665 = vand.u32 %v653, 2147483648
    %v666 = vor.u32 1.1754944e-38, %v665
    %v667 = vsel %vm664, %v666, %v662
    %v668 = vmul.f32 1.0, %v667
    %v669 = vadd.f32 %v458, %v633
    %v670 = vxor.u32 %v669, 2147483648
    %v671 = vmul.f32 %v670, 1.442695
    %v672 = vpow.pop %v671
    %v673 = vadd.f32 %v672, 1.0
    %v674 = vrcp.pop %v673
    %v675 = vmul.f32 %v673, %v674
    %v676 = vsub.f32 1.0, %v675
    %v677 = vmul.f32 %v674, %v676
    %v678 = vadd.f32 %v674, %v677
    %vm679 = vweird.f32 %v673
    %vm680 = vweird.f32 %v674
    %vm681 = vmor %vm679, %vm680
    %v682 = vsel %vm681, %v674, %v678
    %v683 = vand.u32 2147483647, %v673
    %vm684 = vcmp.eq.f32.partialorder %v683, 8.507059e+37
    %v685 = vand.u32 %v673, 2147483648
    %v686 = vor.u32 1.1754944e-38, %v685
    %v687 = vsel %vm684, %v686, %v682
    %v688 = vmul.f32 1.0, %v687
    %v689 = vmul.f32 %v668, %v646
    %v690 = vadd.f32 %v471, %v689
    %v691 = vtanh.pop %v690
    %v692 = vsub.f32 1.0, %v688
    %v693 = vmul.f32 %v692, %v691
    %v694 = vmul.f32 %v688, %v294
    %v695 = vadd.f32 %v693, %v694
    %s696 = sld [smem:[#allocation4 + $0x1]]
    %s697 = scalar_lea.vmem [#allocation2], %s696
    %v698 = vld [vmem:[%s697] sm:$0x1]
    %v699 = vmax.f32 %v698, 0.0
    %v700 = vpack.c.bf16 %v699, %v699
    %701 = vmatpush.bf16.msra.mxu0 %v401
    %702 = vmatpush.bf16.msra.mxu0 %v398
    %703 = vmatpush.bf16.msra.mxu0 %v395
    %704 = vmatpush.bf16.msra.mxu0 %v392
    %705 = vmatpush.bf16.msra.mxu0 %v389
    %706 = vmatpush.bf16.msra.mxu0 %v386
    %707 = vmatpush.bf16.msra.mxu0 %v383
    %708 = vmatpush.bf16.msra.mxu0 %v380
    %709 = vmatmul.bf16.gmra.mxu0 %v700
    %v710 = vpop.f32.mrf.mxu0
    %v711 = vadd.f32 %v429, %v710
    %v712 = vpop.f32.mrf.mxu0
    %713 = vdwg.mxu0
    %714 = vmatpush.bf16.msra.mxu0 %v402
    %715 = vmatpush.bf16.msra.mxu0 %v399
    %716 = vmatpush.bf16.msra.mxu0 %v396
    %717 = vmatpush.bf16.msra.mxu0 %v393
    %718 = vmatpush.bf16.msra.mxu0 %v390
    %719 = vmatpush.bf16.msra.mxu0 %v387
    %720 = vmatpush.bf16.msra.mxu0 %v384
    %721 = vmatpush.bf16.msra.mxu0 %v381
    %722 = vmatmul.bf16.gmra.mxu0 %v700
    %v723 = vpop.f32.mrf.mxu0
    %v724 = vadd.f32 %v430, %v723
    %v725 = vpop.f32.mrf.mxu0
    %726 = vdwg.mxu0
    %727 = vmatpush.bf16.msra.mxu0 %v403
    %728 = vmatpush.bf16.msra.mxu0 %v400
    %729 = vmatpush.bf16.msra.mxu0 %v397
    %730 = vmatpush.bf16.msra.mxu0 %v394
    %731 = vmatpush.bf16.msra.mxu0 %v391
    %732 = vmatpush.bf16.msra.mxu0 %v388
    %733 = vmatpush.bf16.msra.mxu0 %v385
    %734 = vmatpush.bf16.msra.mxu0 %v382
    %735 = vmatmul.bf16.gmra.mxu0 %v700
    %v736 = vpop.f32.mrf.mxu0
    %v737 = vadd.f32 %v431, %v736
    %v738 = vpop.f32.mrf.mxu0
    %739 = vdwg.mxu0
    %v740 = vpack.c.bf16 %v695, %v695
    %741 = vmatpush.bf16.msra.mxu0 %v576
    %742 = vmatpush.bf16.msra.mxu0 %v573
    %743 = vmatpush.bf16.msra.mxu0 %v570
    %744 = vmatpush.bf16.msra.mxu0 %v567
    %745 = vmatpush.bf16.msra.mxu0 %v564
    %746 = vmatpush.bf16.msra.mxu0 %v561
    %747 = vmatpush.bf16.msra.mxu0 %v558
    %748 = vmatpush.bf16.msra.mxu0 %v555
    %749 = vmatmul.bf16.gmra.mxu0 %v740
    %v750 = vpop.f32.mrf.mxu0
    %v751 = vadd.f32 %v604, %v750
    %v752 = vpop.f32.mrf.mxu0
    %753 = vdwg.mxu0
    %754 = vmatpush.bf16.msra.mxu0 %v577
    %755 = vmatpush.bf16.msra.mxu0 %v574
    %756 = vmatpush.bf16.msra.mxu0 %v571
    %757 = vmatpush.bf16.msra.mxu0 %v568
    %758 = vmatpush.bf16.msra.mxu0 %v565
    %759 = vmatpush.bf16.msra.mxu0 %v562
    %760 = vmatpush.bf16.msra.mxu0 %v559
    %761 = vmatpush.bf16.msra.mxu0 %v556
    %762 = vmatmul.bf16.gmra.mxu0 %v740
    %v763 = vpop.f32.mrf.mxu0
    %v764 = vadd.f32 %v605, %v763
    %v765 = vpop.f32.mrf.mxu0
    %766 = vdwg.mxu0
    %767 = vmatpush.bf16.msra.mxu0 %v578
    %768 = vmatpush.bf16.msra.mxu0 %v575
    %769 = vmatpush.bf16.msra.mxu0 %v572
    %770 = vmatpush.bf16.msra.mxu0 %v569
    %771 = vmatpush.bf16.msra.mxu0 %v566
    %772 = vmatpush.bf16.msra.mxu0 %v563
    %773 = vmatpush.bf16.msra.mxu0 %v560
    %774 = vmatpush.bf16.msra.mxu0 %v557
    %775 = vmatmul.bf16.gmra.mxu0 %v740
    %v776 = vpop.f32.mrf.mxu0
    %v777 = vadd.f32 %v606, %v776
    %v778 = vpop.f32.mrf.mxu0
    %779 = vdwg.mxu0
    %v780 = vadd.f32 %v711, %v751
    %v781 = vxor.u32 %v780, 2147483648
    %v782 = vmul.f32 %v781, 1.442695
    %v783 = vpow.pop %v782
    %v784 = vadd.f32 %v783, 1.0
    %v785 = vrcp.pop %v784
    %v786 = vmul.f32 %v784, %v785
    %v787 = vsub.f32 1.0, %v786
    %v788 = vmul.f32 %v785, %v787
    %v789 = vadd.f32 %v785, %v788
    %vm790 = vweird.f32 %v784
    %vm791 = vweird.f32 %v785
    %vm792 = vmor %vm790, %vm791
    %v793 = vsel %vm792, %v785, %v789
    %v794 = vand.u32 2147483647, %v784
    %vm795 = vcmp.eq.f32.partialorder %v794, 8.507059e+37
    %v796 = vand.u32 %v784, 2147483648
    %v797 = vor.u32 1.1754944e-38, %v796
    %v798 = vsel %vm795, %v797, %v793
    %v799 = vmul.f32 1.0, %v798
    %v800 = vadd.f32 %v724, %v764
    %v801 = vxor.u32 %v800, 2147483648
    %v802 = vmul.f32 %v801, 1.442695
    %v803 = vpow.pop %v802
    %v804 = vadd.f32 %v803, 1.0
    %v805 = vrcp.pop %v804
    %v806 = vmul.f32 %v804, %v805
    %v807 = vsub.f32 1.0, %v806
    %v808 = vmul.f32 %v805, %v807
    %v809 = vadd.f32 %v805, %v808
    %vm810 = vweird.f32 %v804
    %vm811 = vweird.f32 %v805
    %vm812 = vmor %vm810, %vm811
    %v813 = vsel %vm812, %v805, %v809
    %v814 = vand.u32 2147483647, %v804
    %vm815 = vcmp.eq.f32.partialorder %v814, 8.507059e+37
    %v816 = vand.u32 %v804, 2147483648
    %v817 = vor.u32 1.1754944e-38, %v816
    %v818 = vsel %vm815, %v817, %v813
    %v819 = vmul.f32 1.0, %v818
    %v820 = vmul.f32 %v799, %v777
    %v821 = vadd.f32 %v737, %v820
    %v822 = vtanh.pop %v821
    %v823 = vsub.f32 1.0, %v819
    %v824 = vmul.f32 %v823, %v822
    %v825 = vmul.f32 %v819, %v695
    %v826 = vadd.f32 %v824, %v825
    %s827 = sld [smem:[#allocation4 + $0x2]]
    %s828 = scalar_lea.vmem [#allocation2], %s827
    %v829 = vld [vmem:[%s828] sm:$0x1]
    %v830 = vmax.f32 %v829, 0.0
    %v831 = vpack.c.bf16 %v830, %v830
    %832 = vmatpush.bf16.msra.mxu0 %v401
    %833 = vmatpush.bf16.msra.mxu0 %v398
    %834 = vmatpush.bf16.msra.mxu0 %v395
    %835 = vmatpush.bf16.msra.mxu0 %v392
    %836 = vmatpush.bf16.msra.mxu0 %v389
    %837 = vmatpush.bf16.msra.mxu0 %v386
    %838 = vmatpush.bf16.msra.mxu0 %v383
    %839 = vmatpush.bf16.msra.mxu0 %v380
    %840 = vmatmul.bf16.gmra.mxu0 %v831
    %v841 = vpop.f32.mrf.mxu0
    %v842 = vadd.f32 %v429, %v841
    %v843 = vpop.f32.mrf.mxu0
    %844 = vdwg.mxu0
    %845 = vmatpush.bf16.msra.mxu0 %v402
    %846 = vmatpush.bf16.msra.mxu0 %v399
    %847 = vmatpush.bf16.msra.mxu0 %v396
    %848 = vmatpush.bf16.msra.mxu0 %v393
    %849 = vmatpush.bf16.msra.mxu0 %v390
    %850 = vmatpush.bf16.msra.mxu0 %v387
    %851 = vmatpush.bf16.msra.mxu0 %v384
    %852 = vmatpush.bf16.msra.mxu0 %v381
    %853 = vmatmul.bf16.gmra.mxu0 %v831
    %v854 = vpop.f32.mrf.mxu0
    %v855 = vadd.f32 %v430, %v854
    %v856 = vpop.f32.mrf.mxu0
    %857 = vdwg.mxu0
    %858 = vmatpush.bf16.msra.mxu0 %v403
    %859 = vmatpush.bf16.msra.mxu0 %v400
    %860 = vmatpush.bf16.msra.mxu0 %v397
    %861 = vmatpush.bf16.msra.mxu0 %v394
    %862 = vmatpush.bf16.msra.mxu0 %v391
    %863 = vmatpush.bf16.msra.mxu0 %v388
    %864 = vmatpush.bf16.msra.mxu0 %v385
    %865 = vmatpush.bf16.msra.mxu0 %v382
    %866 = vmatmul.bf16.gmra.mxu0 %v831
    %v867 = vpop.f32.mrf.mxu0
    %v868 = vadd.f32 %v431, %v867
    %v869 = vpop.f32.mrf.mxu0
    %870 = vdwg.mxu0
    %v871 = vpack.c.bf16 %v826, %v826
    %872 = vmatpush.bf16.msra.mxu0 %v576
    %873 = vmatpush.bf16.msra.mxu0 %v573
    %874 = vmatpush.bf16.msra.mxu0 %v570
    %875 = vmatpush.bf16.msra.mxu0 %v567
    %876 = vmatpush.bf16.msra.mxu0 %v564
    %877 = vmatpush.bf16.msra.mxu0 %v561
    %878 = vmatpush.bf16.msra.mxu0 %v558
    %879 = vmatpush.bf16.msra.mxu0 %v555
    %880 = vmatmul.bf16.gmra.mxu0 %v871
    %v881 = vpop.f32.mrf.mxu0
    %v882 = vadd.f32 %v604, %v881
    %v883 = vpop.f32.mrf.mxu0
    %884 = vdwg.mxu0
    %885 = vmatpush.bf16.msra.mxu0 %v577
    %886 = vmatpush.bf16.msra.mxu0 %v574
    %887 = vmatpush.bf16.msra.mxu0 %v571
    %888 = vmatpush.bf16.msra.mxu0 %v568
    %889 = vmatpush.bf16.msra.mxu0 %v565
    %890 = vmatpush.bf16.msra.mxu0 %v562
    %891 = vmatpush.bf16.msra.mxu0 %v559
    %892 = vmatpush.bf16.msra.mxu0 %v556
    %893 = vmatmul.bf16.gmra.mxu0 %v871
    %v894 = vpop.f32.mrf.mxu0
    %v895 = vadd.f32 %v605, %v894
    %v896 = vpop.f32.mrf.mxu0
    %897 = vdwg.mxu0
    %898 = vmatpush.bf16.msra.mxu0 %v578
    %899 = vmatpush.bf16.msra.mxu0 %v575
    %900 = vmatpush.bf16.msra.mxu0 %v572
    %901 = vmatpush.bf16.msra.mxu0 %v569
    %902 = vmatpush.bf16.msra.mxu0 %v566
    %903 = vmatpush.bf16.msra.mxu0 %v563
    %904 = vmatpush.bf16.msra.mxu0 %v560
    %905 = vmatpush.bf16.msra.mxu0 %v557
    %906 = vmatmul.bf16.gmra.mxu0 %v871
    %v907 = vpop.f32.mrf.mxu0
    %v908 = vadd.f32 %v606, %v907
    %v909 = vpop.f32.mrf.mxu0
    %910 = vdwg.mxu0
    %v911 = vadd.f32 %v842, %v882
    %v912 = vxor.u32 %v911, 2147483648
    %v913 = vmul.f32 %v912, 1.442695
    %v914 = vpow.pop %v913
    %v915 = vadd.f32 %v914, 1.0
    %v916 = vrcp.pop %v915
    %v917 = vmul.f32 %v915, %v916
    %v918 = vsub.f32 1.0, %v917
    %v919 = vmul.f32 %v916, %v918
    %v920 = vadd.f32 %v916, %v919
    %vm921 = vweird.f32 %v915
    %vm922 = vweird.f32 %v916
    %vm923 = vmor %vm921, %vm922
    %v924 = vsel %vm923, %v916, %v920
    %v925 = vand.u32 2147483647, %v915
    %vm926 = vcmp.eq.f32.partialorder %v925, 8.507059e+37
    %v927 = vand.u32 %v915, 2147483648
    %v928 = vor.u32 1.1754944e-38, %v927
    %v929 = vsel %vm926, %v928, %v924
    %v930 = vmul.f32 1.0, %v929
    %v931 = vadd.f32 %v855, %v895
    %v932 = vxor.u32 %v931, 2147483648
    %v933 = vmul.f32 %v932, 1.442695
    %v934 = vpow.pop %v933
    %v935 = vadd.f32 %v934, 1.0
    %v936 = vrcp.pop %v935
    %v937 = vmul.f32 %v935, %v936
    %v938 = vsub.f32 1.0, %v937
    %v939 = vmul.f32 %v936, %v938
    %v940 = vadd.f32 %v936, %v939
    %vm941 = vweird.f32 %v935
    %vm942 = vweird.f32 %v936
    %vm943 = vmor %vm941, %vm942
    %v944 = vsel %vm943, %v936, %v940
    %v945 = vand.u32 2147483647, %v935
    %vm946 = vcmp.eq.f32.partialorder %v945, 8.507059e+37
    %v947 = vand.u32 %v935, 2147483648
    %v948 = vor.u32 1.1754944e-38, %v947
    %v949 = vsel %vm946, %v948, %v944
    %v950 = vmul.f32 1.0, %v949
    %v951 = vmul.f32 %v930, %v908
    %v952 = vadd.f32 %v868, %v951
    %v953 = vtanh.pop %v952
    %v954 = vsub.f32 1.0, %v950
    %v955 = vmul.f32 %v954, %v953
    %v956 = vmul.f32 %v950, %v826
    %v957 = vadd.f32 %v955, %v956
    %s958 = sld [smem:[#allocation4 + $0x3]]
    %s959 = scalar_lea.vmem [#allocation2], %s958
    %v960 = vld [vmem:[%s959] sm:$0x1]
    %v961 = vmax.f32 %v960, 0.0
    %v962 = vpack.c.bf16 %v961, %v961
    %963 = vmatpush.bf16.msra.mxu0 %v401
    %964 = vmatpush.bf16.msra.mxu0 %v398
    %965 = vmatpush.bf16.msra.mxu0 %v395
    %966 = vmatpush.bf16.msra.mxu0 %v392
    %967 = vmatpush.bf16.msra.mxu0 %v389
    %968 = vmatpush.bf16.msra.mxu0 %v386
    %969 = vmatpush.bf16.msra.mxu0 %v383
    %970 = vmatpush.bf16.msra.mxu0 %v380
    %971 = vmatmul.bf16.gmra.mxu0 %v962
    %v972 = vpop.f32.mrf.mxu0
    %v973 = vadd.f32 %v429, %v972
    %v974 = vpop.f32.mrf.mxu0
    %975 = vdwg.mxu0
    %976 = vmatpush.bf16.msra.mxu0 %v402
    %977 = vmatpush.bf16.msra.mxu0 %v399
    %978 = vmatpush.bf16.msra.mxu0 %v396
    %979 = vmatpush.bf16.msra.mxu0 %v393
    %980 = vmatpush.bf16.msra.mxu0 %v390
    %981 = vmatpush.bf16.msra.mxu0 %v387
    %982 = vmatpush.bf16.msra.mxu0 %v384
    %983 = vmatpush.bf16.msra.mxu0 %v381
    %984 = vmatmul.bf16.gmra.mxu0 %v962
    %v985 = vpop.f32.mrf.mxu0
    %v986 = vadd.f32 %v430, %v985
    %v987 = vpop.f32.mrf.mxu0
    %988 = vdwg.mxu0
    %989 = vmatpush.bf16.msra.mxu0 %v403
    %990 = vmatpush.bf16.msra.mxu0 %v400
    %991 = vmatpush.bf16.msra.mxu0 %v397
    %992 = vmatpush.bf16.msra.mxu0 %v394
    %993 = vmatpush.bf16.msra.mxu0 %v391
    %994 = vmatpush.bf16.msra.mxu0 %v388
    %995 = vmatpush.bf16.msra.mxu0 %v385
    %996 = vmatpush.bf16.msra.mxu0 %v382
    %997 = vmatmul.bf16.gmra.mxu0 %v962
    %v998 = vpop.f32.mrf.mxu0
    %v999 = vadd.f32 %v431, %v998
    %v1000 = vpop.f32.mrf.mxu0
    %1001 = vdwg.mxu0
    %v1002 = vpack.c.bf16 %v957, %v957
    %1003 = vmatpush.bf16.msra.mxu0 %v576
    %1004 = vmatpush.bf16.msra.mxu0 %v573
    %1005 = vmatpush.bf16.msra.mxu0 %v570
    %1006 = vmatpush.bf16.msra.mxu0 %v567
    %1007 = vmatpush.bf16.msra.mxu0 %v564
    %1008 = vmatpush.bf16.msra.mxu0 %v561
    %1009 = vmatpush.bf16.msra.mxu0 %v558
    %1010 = vmatpush.bf16.msra.mxu0 %v555
    %1011 = vmatmul.bf16.gmra.mxu0 %v1002
    %v1012 = vpop.f32.mrf.mxu0
    %v1013 = vadd.f32 %v604, %v1012
    %v1014 = vpop.f32.mrf.mxu0
    %1015 = vdwg.mxu0
    %1016 = vmatpush.bf16.msra.mxu0 %v577
    %1017 = vmatpush.bf16.msra.mxu0 %v574
    %1018 = vmatpush.bf16.msra.mxu0 %v571
    %1019 = vmatpush.bf16.msra.mxu0 %v568
    %1020 = vmatpush.bf16.msra.mxu0 %v565
    %1021 = vmatpush.bf16.msra.mxu0 %v562
    %1022 = vmatpush.bf16.msra.mxu0 %v559
    %1023 = vmatpush.bf16.msra.mxu0 %v556
    %1024 = vmatmul.bf16.gmra.mxu0 %v1002
    %v1025 = vpop.f32.mrf.mxu0
    %v1026 = vadd.f32 %v605, %v1025
    %v1027 = vpop.f32.mrf.mxu0
    %1028 = vdwg.mxu0
    %1029 = vmatpush.bf16.msra.mxu0 %v578
    %1030 = vmatpush.bf16.msra.mxu0 %v575
    %1031 = vmatpush.bf16.msra.mxu0 %v572
    %1032 = vmatpush.bf16.msra.mxu0 %v569
    %1033 = vmatpush.bf16.msra.mxu0 %v566
    %1034 = vmatpush.bf16.msra.mxu0 %v563
    %1035 = vmatpush.bf16.msra.mxu0 %v560
    %1036 = vmatpush.bf16.msra.mxu0 %v557
    %1037 = vmatmul.bf16.gmra.mxu0 %v1002
    %v1038 = vpop.f32.mrf.mxu0
    %v1039 = vadd.f32 %v606, %v1038
    %v1040 = vpop.f32.mrf.mxu0
    %1041 = vdwg.mxu0
    %v1042 = vadd.f32 %v973, %v1013
    %v1043 = vxor.u32 %v1042, 2147483648
    %v1044 = vmul.f32 %v1043, 1.442695
    %v1045 = vpow.pop %v1044
    %v1046 = vadd.f32 %v1045, 1.0
    %v1047 = vrcp.pop %v1046
    %v1048 = vmul.f32 %v1046, %v1047
    %v1049 = vsub.f32 1.0, %v1048
    %v1050 = vmul.f32 %v1047, %v1049
    %v1051 = vadd.f32 %v1047, %v1050
    %vm1052 = vweird.f32 %v1046
    %vm1053 = vweird.f32 %v1047
    %vm1054 = vmor %vm1052, %vm1053
    %v1055 = vsel %vm1054, %v1047, %v1051
    %v1056 = vand.u32 2147483647, %v1046
    %vm1057 = vcmp.eq.f32.partialorder %v1056, 8.507059e+37
    %v1058 = vand.u32 %v1046, 2147483648
    %v1059 = vor.u32 1.1754944e-38, %v1058
    %v1060 = vsel %vm1057, %v1059, %v1055
    %v1061 = vmul.f32 1.0, %v1060
    %v1062 = vadd.f32 %v986, %v1026
    %v1063 = vxor.u32 %v1062, 2147483648
    %v1064 = vmul.f32 %v1063, 1.442695
    %v1065 = vpow.pop %v1064
    %v1066 = vadd.f32 %v1065, 1.0
    %v1067 = vrcp.pop %v1066
    %v1068 = vmul.f32 %v1066, %v1067
    %v1069 = vsub.f32 1.0, %v1068
    %v1070 = vmul.f32 %v1067, %v1069
    %v1071 = vadd.f32 %v1067, %v1070
    %vm1072 = vweird.f32 %v1066
    %vm1073 = vweird.f32 %v1067
    %vm1074 = vmor %vm1072, %vm1073
    %v1075 = vsel %vm1074, %v1067, %v1071
    %v1076 = vand.u32 2147483647, %v1066
    %vm1077 = vcmp.eq.f32.partialorder %v1076, 8.507059e+37
    %v1078 = vand.u32 %v1066, 2147483648
    %v1079 = vor.u32 1.1754944e-38, %v1078
    %v1080 = vsel %vm1077, %v1079, %v1075
    %v1081 = vmul.f32 1.0, %v1080
    %v1082 = vmul.f32 %v1061, %v1039
    %v1083 = vadd.f32 %v999, %v1082
    %v1084 = vtanh.pop %v1083
    %v1085 = vsub.f32 1.0, %v1081
    %v1086 = vmul.f32 %v1085, %v1084
    %v1087 = vmul.f32 %v1081, %v957
    %v1088 = vadd.f32 %v1086, %v1087
    %s1089 = sld [smem:[#allocation4 + $0x4]]
    %s1090 = scalar_lea.vmem [#allocation2], %s1089
    %v1091 = vld [vmem:[%s1090] sm:$0x1]
    %v1092 = vmax.f32 %v1091, 0.0
    %v1093 = vpack.c.bf16 %v1092, %v1092
    %1094 = vmatpush.bf16.msra.mxu0 %v401
    %1095 = vmatpush.bf16.msra.mxu0 %v398
    %1096 = vmatpush.bf16.msra.mxu0 %v395
    %1097 = vmatpush.bf16.msra.mxu0 %v392
    %1098 = vmatpush.bf16.msra.mxu0 %v389
    %1099 = vmatpush.bf16.msra.mxu0 %v386
    %1100 = vmatpush.bf16.msra.mxu0 %v383
    %1101 = vmatpush.bf16.msra.mxu0 %v380
    %1102 = vmatmul.bf16.gmra.mxu0 %v1093
    %v1103 = vpop.f32.mrf.mxu0
    %v1104 = vadd.f32 %v429, %v1103
    %v1105 = vpop.f32.mrf.mxu0
    %1106 = vdwg.mxu0
    %1107 = vmatpush.bf16.msra.mxu0 %v402
    %1108 = vmatpush.bf16.msra.mxu0 %v399
    %1109 = vmatpush.bf16.msra.mxu0 %v396
    %1110 = vmatpush.bf16.msra.mxu0 %v393
    %1111 = vmatpush.bf16.msra.mxu0 %v390
    %1112 = vmatpush.bf16.msra.mxu0 %v387
    %1113 = vmatpush.bf16.msra.mxu0 %v384
    %1114 = vmatpush.bf16.msra.mxu0 %v381
    %1115 = vmatmul.bf16.gmra.mxu0 %v1093
    %v1116 = vpop.f32.mrf.mxu0
    %v1117 = vadd.f32 %v430, %v1116
    %v1118 = vpop.f32.mrf.mxu0
    %1119 = vdwg.mxu0
    %1120 = vmatpush.bf16.msra.mxu0 %v403
    %1121 = vmatpush.bf16.msra.mxu0 %v400
    %1122 = vmatpush.bf16.msra.mxu0 %v397
    %1123 = vmatpush.bf16.msra.mxu0 %v394
    %1124 = vmatpush.bf16.msra.mxu0 %v391
    %1125 = vmatpush.bf16.msra.mxu0 %v388
    %1126 = vmatpush.bf16.msra.mxu0 %v385
    %1127 = vmatpush.bf16.msra.mxu0 %v382
    %1128 = vmatmul.bf16.gmra.mxu0 %v1093
    %v1129 = vpop.f32.mrf.mxu0
    %v1130 = vadd.f32 %v431, %v1129
    %v1131 = vpop.f32.mrf.mxu0
    %1132 = vdwg.mxu0
    %v1133 = vpack.c.bf16 %v1088, %v1088
    %1134 = vmatpush.bf16.msra.mxu0 %v576
    %1135 = vmatpush.bf16.msra.mxu0 %v573
    %1136 = vmatpush.bf16.msra.mxu0 %v570
    %1137 = vmatpush.bf16.msra.mxu0 %v567
    %1138 = vmatpush.bf16.msra.mxu0 %v564
    %1139 = vmatpush.bf16.msra.mxu0 %v561
    %1140 = vmatpush.bf16.msra.mxu0 %v558
    %1141 = vmatpush.bf16.msra.mxu0 %v555
    %1142 = vmatmul.bf16.gmra.mxu0 %v1133
    %v1143 = vpop.f32.mrf.mxu0
    %v1144 = vadd.f32 %v604, %v1143
    %v1145 = vpop.f32.mrf.mxu0
    %1146 = vdwg.mxu0
    %1147 = vmatpush.bf16.msra.mxu0 %v577
    %1148 = vmatpush.bf16.msra.mxu0 %v574
    %1149 = vmatpush.bf16.msra.mxu0 %v571
    %1150 = vmatpush.bf16.msra.mxu0 %v568
    %1151 = vmatpush.bf16.msra.mxu0 %v565
    %1152 = vmatpush.bf16.msra.mxu0 %v562
    %1153 = vmatpush.bf16.msra.mxu0 %v559
    %1154 = vmatpush.bf16.msra.mxu0 %v556
    %1155 = vmatmul.bf16.gmra.mxu0 %v1133
    %v1156 = vpop.f32.mrf.mxu0
    %v1157 = vadd.f32 %v605, %v1156
    %v1158 = vpop.f32.mrf.mxu0
    %1159 = vdwg.mxu0
    %1160 = vmatpush.bf16.msra.mxu0 %v578
    %1161 = vmatpush.bf16.msra.mxu0 %v575
    %1162 = vmatpush.bf16.msra.mxu0 %v572
    %1163 = vmatpush.bf16.msra.mxu0 %v569
    %1164 = vmatpush.bf16.msra.mxu0 %v566
    %1165 = vmatpush.bf16.msra.mxu0 %v563
    %1166 = vmatpush.bf16.msra.mxu0 %v560
    %1167 = vmatpush.bf16.msra.mxu0 %v557
    %1168 = vmatmul.bf16.gmra.mxu0 %v1133
    %v1169 = vpop.f32.mrf.mxu0
    %v1170 = vadd.f32 %v606, %v1169
    %v1171 = vpop.f32.mrf.mxu0
    %1172 = vdwg.mxu0
    %v1173 = vadd.f32 %v1104, %v1144
    %v1174 = vxor.u32 %v1173, 2147483648
    %v1175 = vmul.f32 %v1174, 1.442695
    %v1176 = vpow.pop %v1175
    %v1177 = vadd.f32 %v1176, 1.0
    %v1178 = vrcp.pop %v1177
    %v1179 = vmul.f32 %v1177, %v1178
    %v1180 = vsub.f32 1.0, %v1179
    %v1181 = vmul.f32 %v1178, %v1180
    %v1182 = vadd.f32 %v1178, %v1181
    %vm1183 = vweird.f32 %v1177
    %vm1184 = vweird.f32 %v1178
    %vm1185 = vmor %vm1183, %vm1184
    %v1186 = vsel %vm1185, %v1178, %v1182
    %v1187 = vand.u32 2147483647, %v1177
    %vm1188 = vcmp.eq.f32.partialorder %v1187, 8.507059e+37
    %v1189 = vand.u32 %v1177, 2147483648
    %v1190 = vor.u32 1.1754944e-38, %v1189
    %v1191 = vsel %vm1188, %v1190, %v1186
    %v1192 = vmul.f32 1.0, %v1191
    %v1193 = vadd.f32 %v1117, %v1157
    %v1194 = vxor.u32 %v1193, 2147483648
    %v1195 = vmul.f32 %v1194, 1.442695
    %v1196 = vpow.pop %v1195
    %v1197 = vadd.f32 %v1196, 1.0
    %v1198 = vrcp.pop %v1197
    %v1199 = vmul.f32 %v1197, %v1198
    %v1200 = vsub.f32 1.0, %v1199
    %v1201 = vmul.f32 %v1198, %v1200
    %v1202 = vadd.f32 %v1198, %v1201
    %vm1203 = vweird.f32 %v1197
    %vm1204 = vweird.f32 %v1198
    %vm1205 = vmor %vm1203, %vm1204
    %v1206 = vsel %vm1205, %v1198, %v1202
    %v1207 = vand.u32 2147483647, %v1197
    %vm1208 = vcmp.eq.f32.partialorder %v1207, 8.507059e+37
    %v1209 = vand.u32 %v1197, 2147483648
    %v1210 = vor.u32 1.1754944e-38, %v1209
    %v1211 = vsel %vm1208, %v1210, %v1206
    %v1212 = vmul.f32 1.0, %v1211
    %v1213 = vmul.f32 %v1192, %v1170
    %v1214 = vadd.f32 %v1130, %v1213
    %v1215 = vtanh.pop %v1214
    %v1216 = vsub.f32 1.0, %v1212
    %v1217 = vmul.f32 %v1216, %v1215
    %v1218 = vmul.f32 %v1212, %v1088
    %v1219 = vadd.f32 %v1217, %v1218
    %s1220 = sld [smem:[#allocation4 + $0x5]]
    %s1221 = scalar_lea.vmem [#allocation2], %s1220
    %v1222 = vld [vmem:[%s1221] sm:$0x1]
    %v1223 = vmax.f32 %v1222, 0.0
    %v1224 = vpack.c.bf16 %v1223, %v1223
    %1225 = vmatpush.bf16.msra.mxu0 %v401
    %1226 = vmatpush.bf16.msra.mxu0 %v398
    %1227 = vmatpush.bf16.msra.mxu0 %v395
    %1228 = vmatpush.bf16.msra.mxu0 %v392
    %1229 = vmatpush.bf16.msra.mxu0 %v389
    %1230 = vmatpush.bf16.msra.mxu0 %v386
    %1231 = vmatpush.bf16.msra.mxu0 %v383
    %1232 = vmatpush.bf16.msra.mxu0 %v380
    %1233 = vmatmul.bf16.gmra.mxu0 %v1224
    %v1234 = vpop.f32.mrf.mxu0
    %v1235 = vadd.f32 %v429, %v1234
    %v1236 = vpop.f32.mrf.mxu0
    %1237 = vdwg.mxu0
    %1238 = vmatpush.bf16.msra.mxu0 %v402
    %1239 = vmatpush.bf16.msra.mxu0 %v399
    %1240 = vmatpush.bf16.msra.mxu0 %v396
    %1241 = vmatpush.bf16.msra.mxu0 %v393
    %1242 = vmatpush.bf16.msra.mxu0 %v390
    %1243 = vmatpush.bf16.msra.mxu0 %v387
    %1244 = vmatpush.bf16.msra.mxu0 %v384
    %1245 = vmatpush.bf16.msra.mxu0 %v381
    %1246 = vmatmul.bf16.gmra.mxu0 %v1224
    %v1247 = vpop.f32.mrf.mxu0
    %v1248 = vadd.f32 %v430, %v1247
    %v1249 = vpop.f32.mrf.mxu0
    %1250 = vdwg.mxu0
    %1251 = vmatpush.bf16.msra.mxu0 %v403
    %1252 = vmatpush.bf16.msra.mxu0 %v400
    %1253 = vmatpush.bf16.msra.mxu0 %v397
    %1254 = vmatpush.bf16.msra.mxu0 %v394
    %1255 = vmatpush.bf16.msra.mxu0 %v391
    %1256 = vmatpush.bf16.msra.mxu0 %v388
    %1257 = vmatpush.bf16.msra.mxu0 %v385
    %1258 = vmatpush.bf16.msra.mxu0 %v382
    %1259 = vmatmul.bf16.gmra.mxu0 %v1224
    %v1260 = vpop.f32.mrf.mxu0
    %v1261 = vadd.f32 %v431, %v1260
    %v1262 = vpop.f32.mrf.mxu0
    %1263 = vdwg.mxu0
    %v1264 = vpack.c.bf16 %v1219, %v1219
    %1265 = vmatpush.bf16.msra.mxu0 %v576
    %1266 = vmatpush.bf16.msra.mxu0 %v573
    %1267 = vmatpush.bf16.msra.mxu0 %v570
    %1268 = vmatpush.bf16.msra.mxu0 %v567
    %1269 = vmatpush.bf16.msra.mxu0 %v564
    %1270 = vmatpush.bf16.msra.mxu0 %v561
    %1271 = vmatpush.bf16.msra.mxu0 %v558
    %1272 = vmatpush.bf16.msra.mxu0 %v555
    %1273 = vmatmul.bf16.gmra.mxu0 %v1264
    %v1274 = vpop.f32.mrf.mxu0
    %v1275 = vadd.f32 %v604, %v1274
    %v1276 = vpop.f32.mrf.mxu0
    %1277 = vdwg.mxu0
    %1278 = vmatpush.bf16.msra.mxu0 %v577
    %1279 = vmatpush.bf16.msra.mxu0 %v574
    %1280 = vmatpush.bf16.msra.mxu0 %v571
    %1281 = vmatpush.bf16.msra.mxu0 %v568
    %1282 = vmatpush.bf16.msra.mxu0 %v565
    %1283 = vmatpush.bf16.msra.mxu0 %v562
    %1284 = vmatpush.bf16.msra.mxu0 %v559
    %1285 = vmatpush.bf16.msra.mxu0 %v556
    %1286 = vmatmul.bf16.gmra.mxu0 %v1264
    %v1287 = vpop.f32.mrf.mxu0
    %v1288 = vadd.f32 %v605, %v1287
    %v1289 = vpop.f32.mrf.mxu0
    %1290 = vdwg.mxu0
    %1291 = vmatpush.bf16.msra.mxu0 %v578
    %1292 = vmatpush.bf16.msra.mxu0 %v575
    %1293 = vmatpush.bf16.msra.mxu0 %v572
    %1294 = vmatpush.bf16.msra.mxu0 %v569
    %1295 = vmatpush.bf16.msra.mxu0 %v566
    %1296 = vmatpush.bf16.msra.mxu0 %v563
    %1297 = vmatpush.bf16.msra.mxu0 %v560
    %1298 = vmatpush.bf16.msra.mxu0 %v557
    %1299 = vmatmul.bf16.gmra.mxu0 %v1264
    %v1300 = vpop.f32.mrf.mxu0
    %v1301 = vadd.f32 %v606, %v1300
    %v1302 = vpop.f32.mrf.mxu0
    %1303 = vdwg.mxu0
    %v1304 = vadd.f32 %v1235, %v1275
    %v1305 = vxor.u32 %v1304, 2147483648
    %v1306 = vmul.f32 %v1305, 1.442695
    %v1307 = vpow.pop %v1306
    %v1308 = vadd.f32 %v1307, 1.0
    %v1309 = vrcp.pop %v1308
    %v1310 = vmul.f32 %v1308, %v1309
    %v1311 = vsub.f32 1.0, %v1310
    %v1312 = vmul.f32 %v1309, %v1311
    %v1313 = vadd.f32 %v1309, %v1312
    %vm1314 = vweird.f32 %v1308
    %vm1315 = vweird.f32 %v1309
    %vm1316 = vmor %vm1314, %vm1315
    %v1317 = vsel %vm1316, %v1309, %v1313
    %v1318 = vand.u32 2147483647, %v1308
    %vm1319 = vcmp.eq.f32.partialorder %v1318, 8.507059e+37
    %v1320 = vand.u32 %v1308, 2147483648
    %v1321 = vor.u32 1.1754944e-38, %v1320
    %v1322 = vsel %vm1319, %v1321, %v1317
    %v1323 = vmul.f32 1.0, %v1322
    %v1324 = vadd.f32 %v1248, %v1288
    %v1325 = vxor.u32 %v1324, 2147483648
    %v1326 = vmul.f32 %v1325, 1.442695
    %v1327 = vpow.pop %v1326
    %v1328 = vadd.f32 %v1327, 1.0
    %v1329 = vrcp.pop %v1328
    %v1330 = vmul.f32 %v1328, %v1329
    %v1331 = vsub.f32 1.0, %v1330
    %v1332 = vmul.f32 %v1329, %v1331
    %v1333 = vadd.f32 %v1329, %v1332
    %vm1334 = vweird.f32 %v1328
    %vm1335 = vweird.f32 %v1329
    %vm1336 = vmor %vm1334, %vm1335
    %v1337 = vsel %vm1336, %v1329, %v1333
    %v1338 = vand.u32 2147483647, %v1328
    %vm1339 = vcmp.eq.f32.partialorder %v1338, 8.507059e+37
    %v1340 = vand.u32 %v1328, 2147483648
    %v1341 = vor.u32 1.1754944e-38, %v1340
    %v1342 = vsel %vm1339, %v1341, %v1337
    %v1343 = vmul.f32 1.0, %v1342
    %v1344 = vmul.f32 %v1323, %v1301
    %v1345 = vadd.f32 %v1261, %v1344
    %v1346 = vtanh.pop %v1345
    %v1347 = vsub.f32 1.0, %v1343
    %v1348 = vmul.f32 %v1347, %v1346
    %v1349 = vmul.f32 %v1343, %v1219
    %v1350 = vadd.f32 %v1348, %v1349
    %s1351 = sld [smem:[#allocation4 + $0x6]]
    %s1352 = scalar_lea.vmem [#allocation2], %s1351
    %v1353 = vld [vmem:[%s1352] sm:$0x1]
    %v1354 = vmax.f32 %v1353, 0.0
    %v1355 = vpack.c.bf16 %v1354, %v1354
    %1356 = vmatpush.bf16.msra.mxu0 %v401
    %1357 = vmatpush.bf16.msra.mxu0 %v398
    %1358 = vmatpush.bf16.msra.mxu0 %v395
    %1359 = vmatpush.bf16.msra.mxu0 %v392
    %1360 = vmatpush.bf16.msra.mxu0 %v389
    %1361 = vmatpush.bf16.msra.mxu0 %v386
    %1362 = vmatpush.bf16.msra.mxu0 %v383
    %1363 = vmatpush.bf16.msra.mxu0 %v380
    %1364 = vmatmul.bf16.gmra.mxu0 %v1355
    %v1365 = vpop.f32.mrf.mxu0
    %v1366 = vadd.f32 %v429, %v1365
    %v1367 = vpop.f32.mrf.mxu0
    %1368 = vdwg.mxu0
    %1369 = vmatpush.bf16.msra.mxu0 %v402
    %1370 = vmatpush.bf16.msra.mxu0 %v399
    %1371 = vmatpush.bf16.msra.mxu0 %v396
    %1372 = vmatpush.bf16.msra.mxu0 %v393
    %1373 = vmatpush.bf16.msra.mxu0 %v390
    %1374 = vmatpush.bf16.msra.mxu0 %v387
    %1375 = vmatpush.bf16.msra.mxu0 %v384
    %1376 = vmatpush.bf16.msra.mxu0 %v381
    %1377 = vmatmul.bf16.gmra.mxu0 %v1355
    %v1378 = vpop.f32.mrf.mxu0
    %v1379 = vadd.f32 %v430, %v1378
    %v1380 = vpop.f32.mrf.mxu0
    %1381 = vdwg.mxu0
    %1382 = vmatpush.bf16.msra.mxu0 %v403
    %1383 = vmatpush.bf16.msra.mxu0 %v400
    %1384 = vmatpush.bf16.msra.mxu0 %v397
    %1385 = vmatpush.bf16.msra.mxu0 %v394
    %1386 = vmatpush.bf16.msra.mxu0 %v391
    %1387 = vmatpush.bf16.msra.mxu0 %v388
    %1388 = vmatpush.bf16.msra.mxu0 %v385
    %1389 = vmatpush.bf16.msra.mxu0 %v382
    %1390 = vmatmul.bf16.gmra.mxu0 %v1355
    %v1391 = vpop.f32.mrf.mxu0
    %v1392 = vadd.f32 %v431, %v1391
    %v1393 = vpop.f32.mrf.mxu0
    %1394 = vdwg.mxu0
    %v1395 = vpack.c.bf16 %v1350, %v1350
    %1396 = vmatpush.bf16.msra.mxu0 %v576
    %1397 = vmatpush.bf16.msra.mxu0 %v573
    %1398 = vmatpush.bf16.msra.mxu0 %v570
    %1399 = vmatpush.bf16.msra.mxu0 %v567
    %1400 = vmatpush.bf16.msra.mxu0 %v564
    %1401 = vmatpush.bf16.msra.mxu0 %v561
    %1402 = vmatpush.bf16.msra.mxu0 %v558
    %1403 = vmatpush.bf16.msra.mxu0 %v555
    %1404 = vmatmul.bf16.gmra.mxu0 %v1395
    %v1405 = vpop.f32.mrf.mxu0
    %v1406 = vadd.f32 %v604, %v1405
    %v1407 = vpop.f32.mrf.mxu0
    %1408 = vdwg.mxu0
    %1409 = vmatpush.bf16.msra.mxu0 %v577
    %1410 = vmatpush.bf16.msra.mxu0 %v574
    %1411 = vmatpush.bf16.msra.mxu0 %v571
    %1412 = vmatpush.bf16.msra.mxu0 %v568
    %1413 = vmatpush.bf16.msra.mxu0 %v565
    %1414 = vmatpush.bf16.msra.mxu0 %v562
    %1415 = vmatpush.bf16.msra.mxu0 %v559
    %1416 = vmatpush.bf16.msra.mxu0 %v556
    %1417 = vmatmul.bf16.gmra.mxu0 %v1395
    %v1418 = vpop.f32.mrf.mxu0
    %v1419 = vadd.f32 %v605, %v1418
    %v1420 = vpop.f32.mrf.mxu0
    %1421 = vdwg.mxu0
    %1422 = vmatpush.bf16.msra.mxu0 %v578
    %1423 = vmatpush.bf16.msra.mxu0 %v575
    %1424 = vmatpush.bf16.msra.mxu0 %v572
    %1425 = vmatpush.bf16.msra.mxu0 %v569
    %1426 = vmatpush.bf16.msra.mxu0 %v566
    %1427 = vmatpush.bf16.msra.mxu0 %v563
    %1428 = vmatpush.bf16.msra.mxu0 %v560
    %1429 = vmatpush.bf16.msra.mxu0 %v557
    %1430 = vmatmul.bf16.gmra.mxu0 %v1395
    %v1431 = vpop.f32.mrf.mxu0
    %v1432 = vadd.f32 %v606, %v1431
    %v1433 = vpop.f32.mrf.mxu0
    %1434 = vdwg.mxu0
    %v1435 = vadd.f32 %v1366, %v1406
    %v1436 = vxor.u32 %v1435, 2147483648
    %v1437 = vmul.f32 %v1436, 1.442695
    %v1438 = vpow.pop %v1437
    %v1439 = vadd.f32 %v1438, 1.0
    %v1440 = vrcp.pop %v1439
    %v1441 = vmul.f32 %v1439, %v1440
    %v1442 = vsub.f32 1.0, %v1441
    %v1443 = vmul.f32 %v1440, %v1442
    %v1444 = vadd.f32 %v1440, %v1443
    %vm1445 = vweird.f32 %v1439
    %vm1446 = vweird.f32 %v1440
    %vm1447 = vmor %vm1445, %vm1446
    %v1448 = vsel %vm1447, %v1440, %v1444
    %v1449 = vand.u32 2147483647, %v1439
    %vm1450 = vcmp.eq.f32.partialorder %v1449, 8.507059e+37
    %v1451 = vand.u32 %v1439, 2147483648
    %v1452 = vor.u32 1.1754944e-38, %v1451
    %v1453 = vsel %vm1450, %v1452, %v1448
    %v1454 = vmul.f32 1.0, %v1453
    %v1455 = vadd.f32 %v1379, %v1419
    %v1456 = vxor.u32 %v1455, 2147483648
    %v1457 = vmul.f32 %v1456, 1.442695
    %v1458 = vpow.pop %v1457
    %v1459 = vadd.f32 %v1458, 1.0
    %v1460 = vrcp.pop %v1459
    %v1461 = vmul.f32 %v1459, %v1460
    %v1462 = vsub.f32 1.0, %v1461
    %v1463 = vmul.f32 %v1460, %v1462
    %v1464 = vadd.f32 %v1460, %v1463
    %vm1465 = vweird.f32 %v1459
    %vm1466 = vweird.f32 %v1460
    %vm1467 = vmor %vm1465, %vm1466
    %v1468 = vsel %vm1467, %v1460, %v1464
    %v1469 = vand.u32 2147483647, %v1459
    %vm1470 = vcmp.eq.f32.partialorder %v1469, 8.507059e+37
    %v1471 = vand.u32 %v1459, 2147483648
    %v1472 = vor.u32 1.1754944e-38, %v1471
    %v1473 = vsel %vm1470, %v1472, %v1468
    %v1474 = vmul.f32 1.0, %v1473
    %v1475 = vmul.f32 %v1454, %v1432
    %v1476 = vadd.f32 %v1392, %v1475
    %v1477 = vtanh.pop %v1476
    %v1478 = vsub.f32 1.0, %v1474
    %v1479 = vmul.f32 %v1478, %v1477
    %v1480 = vmul.f32 %v1474, %v1350
    %v1481 = vadd.f32 %v1479, %v1480
    %s1482 = sld [smem:[#allocation4 + $0x7]]
    %s1483 = scalar_lea.vmem [#allocation2], %s1482
    %v1484 = vld [vmem:[%s1483] sm:$0x1]
    %v1485 = vmax.f32 %v1484, 0.0
    %v1486 = vpack.c.bf16 %v1485, %v1485
    %1487 = vmatpush.bf16.msra.mxu0 %v401
    %1488 = vmatpush.bf16.msra.mxu0 %v398
    %1489 = vmatpush.bf16.msra.mxu0 %v395
    %1490 = vmatpush.bf16.msra.mxu0 %v392
    %1491 = vmatpush.bf16.msra.mxu0 %v389
    %1492 = vmatpush.bf16.msra.mxu0 %v386
    %1493 = vmatpush.bf16.msra.mxu0 %v383
    %1494 = vmatpush.bf16.msra.mxu0 %v380
    %1495 = vmatmul.bf16.gmra.mxu0 %v1486
    %v1496 = vpop.f32.mrf.mxu0
    %v1497 = vadd.f32 %v429, %v1496
    %v1498 = vpop.f32.mrf.mxu0
    %1499 = vdwg.mxu0
    %1500 = vmatpush.bf16.msra.mxu0 %v402
    %1501 = vmatpush.bf16.msra.mxu0 %v399
    %1502 = vmatpush.bf16.msra.mxu0 %v396
    %1503 = vmatpush.bf16.msra.mxu0 %v393
    %1504 = vmatpush.bf16.msra.mxu0 %v390
    %1505 = vmatpush.bf16.msra.mxu0 %v387
    %1506 = vmatpush.bf16.msra.mxu0 %v384
    %1507 = vmatpush.bf16.msra.mxu0 %v381
    %1508 = vmatmul.bf16.gmra.mxu0 %v1486
    %v1509 = vpop.f32.mrf.mxu0
    %v1510 = vadd.f32 %v430, %v1509
    %v1511 = vpop.f32.mrf.mxu0
    %1512 = vdwg.mxu0
    %1513 = vmatpush.bf16.msra.mxu0 %v403
    %1514 = vmatpush.bf16.msra.mxu0 %v400
    %1515 = vmatpush.bf16.msra.mxu0 %v397
    %1516 = vmatpush.bf16.msra.mxu0 %v394
    %1517 = vmatpush.bf16.msra.mxu0 %v391
    %1518 = vmatpush.bf16.msra.mxu0 %v388
    %1519 = vmatpush.bf16.msra.mxu0 %v385
    %1520 = vmatpush.bf16.msra.mxu0 %v382
    %1521 = vmatmul.bf16.gmra.mxu0 %v1486
    %v1522 = vpop.f32.mrf.mxu0
    %v1523 = vadd.f32 %v431, %v1522
    %v1524 = vpop.f32.mrf.mxu0
    %1525 = vdwg.mxu0
    %v1526 = vpack.c.bf16 %v1481, %v1481
    %1527 = vmatpush.bf16.msra.mxu0 %v576
    %1528 = vmatpush.bf16.msra.mxu0 %v573
    %1529 = vmatpush.bf16.msra.mxu0 %v570
    %1530 = vmatpush.bf16.msra.mxu0 %v567
    %1531 = vmatpush.bf16.msra.mxu0 %v564
    %1532 = vmatpush.bf16.msra.mxu0 %v561
    %1533 = vmatpush.bf16.msra.mxu0 %v558
    %1534 = vmatpush.bf16.msra.mxu0 %v555
    %1535 = vmatmul.bf16.gmra.mxu0 %v1526
    %v1536 = vpop.f32.mrf.mxu0
    %v1537 = vadd.f32 %v604, %v1536
    %v1538 = vpop.f32.mrf.mxu0
    %1539 = vdwg.mxu0
    %1540 = vmatpush.bf16.msra.mxu0 %v577
    %1541 = vmatpush.bf16.msra.mxu0 %v574
    %1542 = vmatpush.bf16.msra.mxu0 %v571
    %1543 = vmatpush.bf16.msra.mxu0 %v568
    %1544 = vmatpush.bf16.msra.mxu0 %v565
    %1545 = vmatpush.bf16.msra.mxu0 %v562
    %1546 = vmatpush.bf16.msra.mxu0 %v559
    %1547 = vmatpush.bf16.msra.mxu0 %v556
    %1548 = vmatmul.bf16.gmra.mxu0 %v1526
    %v1549 = vpop.f32.mrf.mxu0
    %v1550 = vadd.f32 %v605, %v1549
    %v1551 = vpop.f32.mrf.mxu0
    %1552 = vdwg.mxu0
    %1553 = vmatpush.bf16.msra.mxu0 %v578
    %1554 = vmatpush.bf16.msra.mxu0 %v575
    %1555 = vmatpush.bf16.msra.mxu0 %v572
    %1556 = vmatpush.bf16.msra.mxu0 %v569
    %1557 = vmatpush.bf16.msra.mxu0 %v566
    %1558 = vmatpush.bf16.msra.mxu0 %v563
    %1559 = vmatpush.bf16.msra.mxu0 %v560
    %1560 = vmatpush.bf16.msra.mxu0 %v557
    %1561 = vmatmul.bf16.gmra.mxu0 %v1526
    %v1562 = vpop.f32.mrf.mxu0
    %v1563 = vadd.f32 %v606, %v1562
    %v1564 = vpop.f32.mrf.mxu0
    %1565 = vdwg.mxu0
    %v1566 = vadd.f32 %v1497, %v1537
    %v1567 = vxor.u32 %v1566, 2147483648
    %v1568 = vmul.f32 %v1567, 1.442695
    %v1569 = vpow.pop %v1568
    %v1570 = vadd.f32 %v1569, 1.0
    %v1571 = vrcp.pop %v1570
    %v1572 = vmul.f32 %v1570, %v1571
    %v1573 = vsub.f32 1.0, %v1572
    %v1574 = vmul.f32 %v1571, %v1573
    %v1575 = vadd.f32 %v1571, %v1574
    %vm1576 = vweird.f32 %v1570
    %vm1577 = vweird.f32 %v1571
    %vm1578 = vmor %vm1576, %vm1577
    %v1579 = vsel %vm1578, %v1571, %v1575
    %v1580 = vand.u32 2147483647, %v1570
    %vm1581 = vcmp.eq.f32.partialorder %v1580, 8.507059e+37
    %v1582 = vand.u32 %v1570, 2147483648
    %v1583 = vor.u32 1.1754944e-38, %v1582
    %v1584 = vsel %vm1581, %v1583, %v1579
    %v1585 = vmul.f32 1.0, %v1584
    %v1586 = vadd.f32 %v1510, %v1550
    %v1587 = vxor.u32 %v1586, 2147483648
    %v1588 = vmul.f32 %v1587, 1.442695
    %v1589 = vpow.pop %v1588
    %v1590 = vadd.f32 %v1589, 1.0
    %v1591 = vrcp.pop %v1590
    %v1592 = vmul.f32 %v1590, %v1591
    %v1593 = vsub.f32 1.0, %v1592
    %v1594 = vmul.f32 %v1591, %v1593
    %v1595 = vadd.f32 %v1591, %v1594
    %vm1596 = vweird.f32 %v1590
    %vm1597 = vweird.f32 %v1591
    %vm1598 = vmor %vm1596, %vm1597
    %v1599 = vsel %vm1598, %v1591, %v1595
    %v1600 = vand.u32 2147483647, %v1590
    %vm1601 = vcmp.eq.f32.partialorder %v1600, 8.507059e+37
    %v1602 = vand.u32 %v1590, 2147483648
    %v1603 = vor.u32 1.1754944e-38, %v1602
    %v1604 = vsel %vm1601, %v1603, %v1599
    %v1605 = vmul.f32 1.0, %v1604
    %v1606 = vmul.f32 %v1585, %v1563
    %v1607 = vadd.f32 %v1523, %v1606
    %v1608 = vtanh.pop %v1607
    %v1609 = vsub.f32 1.0, %v1605
    %v1610 = vmul.f32 %v1609, %v1608
    %v1611 = vmul.f32 %v1605, %v1481
    %v1612 = vadd.f32 %v1610, %v1611
    %1613 = vst [vmem:[#allocation17] sm:$0x1] %v1612
    %v1615 = vrot.slane %v826, 7
    %v1618 = vrot.slane %v957, 6
    %v1621 = vrot.slane %v1088, 5
    %v1624 = vrot.slane %v1219, 4
    %v1627 = vrot.slane %v1350, 3
    %v1630 = vrot.slane %v1481, 2
    %v1633 = vrot.slane %v1612, 1
    %vm1635 = vcmask 1040384
    %v1636 = vsel %vm1635, %v695, %v1615
    %vm1637 = vcmask 1041408
    %v1638 = vsel %vm1637, %v1636, %v1618
    %vm1639 = vcmask 1042432
    %v1640 = vsel %vm1639, %v1638, %v1621
    %vm1641 = vcmask 1043456
    %v1642 = vsel %vm1641, %v1640, %v1624
    %vm1643 = vcmask 1044480
    %v1644 = vsel %vm1643, %v1642, %v1627
    %vm1645 = vcmask 1045504
    %v1646 = vsel %vm1645, %v1644, %v1630
    %vm1647 = vcmask 1046528
    %v1648 = vsel %vm1647, %v1646, %v1633
    %v1649 = vpack.c.bf16 %v1648, %v1648
    %v1650 = vld [vmem:[#allocation14] sm:$0xff]
    %v1651 = vld [vmem:[#allocation14 + $0x8] sm:$0xff]
    %v1652 = vld [vmem:[#allocation14 + $0x10] sm:$0xff]
    %v1653 = vld [vmem:[#allocation14 + $0x18] sm:$0xff]
    %v1654 = vld [vmem:[#allocation14 + $0x20] sm:$0xff]
    %v1655 = vld [vmem:[#allocation14 + $0x28] sm:$0xff]
    %v1656 = vld [vmem:[#allocation14 + $0x30] sm:$0xff]
    %v1657 = vld [vmem:[#allocation14 + $0x38] sm:$0xff]
    %v1658 = vld [vmem:[#allocation14 + $0x40] sm:$0xff]
    %v1659 = vld [vmem:[#allocation14 + $0x48] sm:$0xff]
    %v1660 = vld [vmem:[#allocation14 + $0x50] sm:$0xff]
    %v1661 = vld [vmem:[#allocation14 + $0x58] sm:$0xff]
    %v1662 = vld [vmem:[#allocation14 + $0x60] sm:$0xff]
    %v1663 = vld [vmem:[#allocation14 + $0x68] sm:$0xff]
    %v1664 = vld [vmem:[#allocation14 + $0x70] sm:$0xff]
    %v1665 = vld [vmem:[#allocation14 + $0x78] sm:$0xff]
    %v1666 = vld [vmem:[%s8] sm:$0x3]
    %v1668 = vperm.slane %v1666, 0
    %v1669 = vperm.slane %v1666, 1
    %v1688 = vunpack.c.l.b16 %v1650
    %v1689 = vunpack.c.h.b16 %v1650
    %v1690 = vunpack.c.l.b16 %v1651
    %v1691 = vunpack.c.h.b16 %v1651
    %v1692 = vunpack.c.l.b16 %v1652
    %v1693 = vunpack.c.h.b16 %v1652
    %v1694 = vunpack.c.l.b16 %v1653
    %v1695 = vunpack.c.h.b16 %v1653
    %v1696 = vunpack.c.l.b16 %v1654
    %v1697 = vunpack.c.h.b16 %v1654
    %v1698 = vunpack.c.l.b16 %v1655
    %v1699 = vunpack.c.h.b16 %v1655
    %v1700 = vunpack.c.l.b16 %v1656
    %v1701 = vunpack.c.h.b16 %v1656
    %v1702 = vunpack.c.l.b16 %v1657
    %v1703 = vunpack.c.h.b16 %v1657
    %v1704 = vunpack.c.l.b16 %v1658
    %v1705 = vunpack.c.h.b16 %v1658
    %v1706 = vunpack.c.l.b16 %v1659
    %v1707 = vunpack.c.h.b16 %v1659
    %v1708 = vunpack.c.l.b16 %v1660
    %v1709 = vunpack.c.h.b16 %v1660
    %v1710 = vunpack.c.l.b16 %v1661
    %v1711 = vunpack.c.h.b16 %v1661
    %v1712 = vunpack.c.l.b16 %v1662
    %v1713 = vunpack.c.h.b16 %v1662
    %v1714 = vunpack.c.l.b16 %v1663
    %v1715 = vunpack.c.h.b16 %v1663
    %v1716 = vunpack.c.l.b16 %v1664
    %v1717 = vunpack.c.h.b16 %v1664
    %v1718 = vunpack.c.l.b16 %v1665
    %v1719 = vunpack.c.h.b16 %v1665
    %v1720 = vpack.c.b16 %v1690, %v1688
    %v1721 = vpack.c.b16 %v1691, %v1689
    %v1722 = vpack.c.b16 %v1694, %v1692
    %v1723 = vpack.c.b16 %v1695, %v1693
    %v1724 = vpack.c.b16 %v1698, %v1696
    %v1725 = vpack.c.b16 %v1699, %v1697
    %v1726 = vpack.c.b16 %v1702, %v1700
    %v1727 = vpack.c.b16 %v1703, %v1701
    %v1728 = vpack.c.b16 %v1706, %v1704
    %v1729 = vpack.c.b16 %v1707, %v1705
    %v1730 = vpack.c.b16 %v1710, %v1708
    %v1731 = vpack.c.b16 %v1711, %v1709
    %v1732 = vpack.c.b16 %v1714, %v1712
    %v1733 = vpack.c.b16 %v1715, %v1713
    %v1734 = vpack.c.b16 %v1718, %v1716
    %v1735 = vpack.c.b16 %v1719, %v1717
    %1752 = vmatpush.bf16.msra.mxu0 %v1734
    %1753 = vmatpush.bf16.msra.mxu0 %v1732
    %1754 = vmatpush.bf16.msra.mxu0 %v1730
    %1755 = vmatpush.bf16.msra.mxu0 %v1728
    %1756 = vmatpush.bf16.msra.mxu0 %v1726
    %1757 = vmatpush.bf16.msra.mxu0 %v1724
    %1758 = vmatpush.bf16.msra.mxu0 %v1722
    %1759 = vmatpush.bf16.msra.mxu0 %v1720
    %1760 = vmatmul.bf16.gmra.mxu0 %v1649
    %v1761 = vpop.f32.mrf.mxu0
    %v1762 = vadd.f32 %v1668, %v1761
    %v1763 = vpop.f32.mrf.mxu0
    %1764 = vdwg.mxu0
    %1765 = vmatpush.bf16.msra.mxu0 %v1735
    %1766 = vmatpush.bf16.msra.mxu0 %v1733
    %1767 = vmatpush.bf16.msra.mxu0 %v1731
    %1768 = vmatpush.bf16.msra.mxu0 %v1729
    %1769 = vmatpush.bf16.msra.mxu0 %v1727
    %1770 = vmatpush.bf16.msra.mxu0 %v1725
    %1771 = vmatpush.bf16.msra.mxu0 %v1723
    %1772 = vmatpush.bf16.msra.mxu0 %v1721
    %1773 = vmatmul.bf16.gmra.mxu0 %v1649
    %v1774 = vpop.f32.mrf.mxu0
    %v1775 = vadd.f32 %v1669, %v1774
    %v1776 = vpop.f32.mrf.mxu0
    %1777 = vdwg.mxu0
    %v1778 = vmax.f32 %v1762, %v1775
    %1779 = vmax.xlane.f32.xlu0 %v1778
    %v1780 = vpop.xlane.xlu0 %1779
    %v1781 = vsub.f32 %v1762, %v1780
    %v1782 = vsub.f32 %v1775, %v1780
    %v1783 = vmul.f32 %v1781, 1.442695
    %v1784 = vpow.pop %v1783
    %v1785 = vmul.f32 %v1782, 1.442695
    %v1786 = vpow.pop %v1785
    %v1787 = vadd.f32 %v1784, %v1786
    %1788 = vadd.xlane.f32.xlu0 %v1787
    %v1789 = vpop.xlane.xlu0 %1788
    %v1790 = vlog2.pop %v1789
    %v1791 = vmul.f32 %v1790, 0.6931472
    %v1792 = vadd.f32 %v1791, %v1780
    %v1793 = vsub.f32 %v1762, %v1792
    %v1794 = vsub.f32 %v1775, %v1792
    %1795 = vst [vmem:[#allocation16] sm:$0xff] %v1793
    %1796 = vst [vmem:[#allocation16 + $0x8] sm:$0xff] %v1794
    // Predicated region
    $region58: #{decoder_forward.1} parent=1 // pred_check
      _
    $region59: #{decoder_forward.1} parent=1 // pred_check_branch
      %1798 = sbr.rel (0) target = $region61
    $region60: #{decoder_forward.1} parent=1 // pred_region
      %1800 = vsyncadd [#allocation7], 0
      %s1802 = sshll.u32 [#allocation16], 4
      %s1803 = int_to_ptr.vmem [resolvable:$true] %s1802
      %s1804 = sshll.u32 %s9, 4
      %s1805 = int_to_ptr.hbm [resolvable:$true] %s1804
      %1807 = dma.vmem_to_hbm [thread:$0]  %s1803, 256, %s1805, [#allocation7]
    $region61: #{decoder_forward.1} parent=1 // pred_fallthru
      _
    // Predicated region
    $region62: #{decoder_forward.1} parent=1 // pred_check
      _
    $region63: #{decoder_forward.1} parent=1 // pred_check_branch
      %1809 = sbr.rel (0) target = $region65
    $region64: #{decoder_forward.1} parent=1 // pred_region
      %1811 = vsyncadd [#allocation18], 0
      %s1813 = sshll.u32 [#allocation17], 4
      %s1814 = int_to_ptr.vmem [resolvable:$true] %s1813
      %s1815 = sshll.u32 %s10, 4
      %s1816 = int_to_ptr.hbm [resolvable:$true] %s1815
      %1818 = dma.vmem_to_hbm [thread:$0]  %s1814, 16, %s1816, [#allocation18]
    $region65: #{decoder_forward.1} parent=1 // pred_fallthru
      _
    // Predicated region
    $region66: #{decoder_forward.1} parent=1 // pred_check
      _
    $region67: #{decoder_forward.1} parent=1 // pred_check_branch
      %1820 = sbr.rel (0) target = $region69
    $region68: #{decoder_forward.1} parent=1 // pred_region
      %1822 = dma.done [#allocation7], 256
    $region69: #{decoder_forward.1} parent=1 // pred_fallthru
      _
    // Predicated region
    $region70: #{decoder_forward.1} parent=1 // pred_check
      _
    $region71: #{decoder_forward.1} parent=1 // pred_check_branch
      %1824 = sbr.rel (0) target = $region73
    $region72: #{decoder_forward.1} parent=1 // pred_region
      %1826 = dma.done [#allocation18], 16
    $region73: #{decoder_forward.1} parent=1 // pred_fallthru
      _
    %1827 = vsyncpa [#allocation6], 1
    %1828 = vsyncpa [#allocation9], 1
    %1829 = vsyncpa [#allocation12], 1
    %1830 = vsyncpa [#allocation15], 1
    %1831 = vsyncpa [#allocation7], 1
    %1832 = vsyncpa [#allocation18], 1

</llo_original>
